<compile_context>
chip_gen: v5e
topology: v5e:2x2
jax: 0.10.0
libtpu: 0.0.40
codegen_flags: <defaults>
</compile_context>

<pallas_src>
import functools

import jax
import jax.numpy as jnp
from jax.experimental import pallas as pl
from jax.experimental.pallas import tpu as pltpu


# ---------------------------------------------------------------------------
# Pallas kernel: full GAT layer stack for one lane-dense block of nodes
# ---------------------------------------------------------------------------
def gat_block_kernel(x_ref, mask_ref, w_ref, att_ref, bias_ref, out_ref, *, num_layers):
    h = x_ref[...]                                   # (NB, CP) f32, zero-padded channels
    mask_add = mask_ref[0].astype(jnp.float32)       # (NB, NB): 0 on edges, -1e30 elsewhere

    for li in range(num_layers):                     # static unrolled layer loop
        # feature transform on the MXU: bf16 operands, f32 accumulate.
        # zero-padded weight rows/cols keep padded channels exactly 0.
        h = jnp.dot(h.astype(jnp.bfloat16), w_ref[li],
                    preferred_element_type=jnp.float32)             # (NB, CP) f32

        # attention scores via one lane-dense MXU matmul:
        # att_ref[li] is (CP, 128) with a_src in col 0, a_dst in col 1, zeros elsewhere.
        s = jnp.dot(h.astype(jnp.bfloat16), att_ref[li],
                    preferred_element_type=jnp.float32)             # (NB, 128) f32
        s_src = s[:, 0:1]                                           # (NB, 1)
        s_dst = s[:, 1:2]                                           # (NB, 1)

        # e[i, j] = a_dst.h_i + a_src.h_j ; LeakyReLU(0.2) ; additive edge mask
        e = s_dst + jnp.transpose(s_src)                            # (NB, NB)
        e = jnp.maximum(e, 0.2 * e)                                 # LeakyReLU, slope 0.2
        e = e + mask_add

        # masked softmax over source nodes j (per destination i), f32.
        # every row has a self-loop, so m is finite and masked exp() underflows to 0.
        m = jnp.max(e, axis=-1, keepdims=True)
        p = jnp.exp(e - m)
        denom = jnp.sum(p, axis=-1, keepdims=True)                  # >= 1
        alpha = p * pl.reciprocal(denom, approx=True)

        # aggregate messages + bias (padded bias cols are 0)
        h = jnp.dot(alpha.astype(jnp.bfloat16), h.astype(jnp.bfloat16),
                    preferred_element_type=jnp.float32) + bias_ref[li]
        if li < num_layers - 1:
            h = jnp.maximum(h, 0.0)

    out_ref[...] = h.astype(out_ref.dtype)


# ---------------------------------------------------------------------------
# Parameter construction & packing (deterministic, glorot-style) — plain JAX
# ---------------------------------------------------------------------------
def build_gat_params(key, in_channels, hidden_channels, num_layers, out_channels):
    dims = [in_channels] + [hidden_channels] * (num_layers - 1) + [out_channels]
    params = []
    for li in range(num_layers):
        c_in, c_out = dims[li], dims[li + 1]
        key, k_w, k_s, k_d = jax.random.split(key, 4)
        scale_w = (6.0 / (c_in + c_out)) ** 0.5
        w_t = jax.random.uniform(k_w, (c_in, c_out), jnp.float32,
                                 minval=-scale_w, maxval=scale_w)
        scale_a = (6.0 / (c_out + 1)) ** 0.5
        att_src = jax.random.uniform(k_s, (c_out,), jnp.float32,
                                     minval=-scale_a, maxval=scale_a)
        att_dst = jax.random.uniform(k_d, (c_out,), jnp.float32,
                                     minval=-scale_a, maxval=scale_a)
        bias = jnp.zeros((c_out,), jnp.float32)
        params.append(dict(w_t=w_t, att_src=att_src, att_dst=att_dst, bias=bias))
    return params


def pack_params(params, cp):
    """Zero-pad params to lane-dense width `cp`; matmul operands stored in bf16."""
    num_layers = len(params)
    w_stack = jnp.zeros((num_layers, cp, cp), jnp.float32)
    att_stack = jnp.zeros((num_layers, cp, 128), jnp.float32)   # col 0 = a_src, col 1 = a_dst
    bias_stack = jnp.zeros((num_layers, 1, cp), jnp.float32)
    for li, p in enumerate(params):
        c_in, c_out = p["w_t"].shape
        w_stack = w_stack.at[li, :c_in, :c_out].set(p["w_t"])
        att_stack = att_stack.at[li, :c_out, 0].set(p["att_src"])
        att_stack = att_stack.at[li, :c_out, 1].set(p["att_dst"])
        bias_stack = bias_stack.at[li, 0, :c_out].set(p["bias"])
    return (w_stack.astype(jnp.bfloat16),
            att_stack.astype(jnp.bfloat16),
            bias_stack)                                  # bias stays f32 (added to f32 acc)


def build_block_masks(edge_index, num_blocks, nb):
    """Per-block additive attention masks (bf16): 0 on edges/self-loops, -1e30 elsewhere.

    Graphs are stacked along the node axis; each lane-dense block of `nb` nodes holds
    whole graphs only, so the global adjacency is block-diagonal over blocks.  Padded
    rows get a self-loop only: their softmax denominator stays >= 1 (finite, no NaN)
    and their zero columns keep them out of every real node's aggregation.
    """
    n_pad = num_blocks * nb
    src, dst = edge_index[0], edge_index[1]
    # setup-time sanity check: no edge may cross a block boundary
    assert bool(jnp.all((src // nb) == (dst // nb))), "edges must not cross node blocks"
    adj = jnp.zeros((n_pad, n_pad), jnp.float32).at[dst, src].set(1.0)
    idx = jnp.arange(n_pad)
    adj = adj.at[idx, idx].set(1.0)                      # self loops (incl. padded rows)
    blocks = adj.reshape(num_blocks, nb, num_blocks, nb)
    barange = jnp.arange(num_blocks)
    blocks = blocks[barange, :, barange, :]              # (num_blocks, nb, nb) diag blocks
    mask_add = (blocks - 1.0) * jnp.float32(1e30)        # 0 on edges, -1e30 elsewhere
    return mask_add.astype(jnp.bfloat16)


def build_dense_adj(edge_index, n):
    """Full dense adjacency (+ self loops) for the pure-JAX reference only."""
    src, dst = edge_index[0], edge_index[1]
    adj = jnp.zeros((n, n), jnp.float32).at[dst, src].set(1.0)
    idx = jnp.arange(n)
    return adj.at[idx, idx].set(1.0)


# ---------------------------------------------------------------------------
# Forward pass: one pallas_call, grid over node blocks (parallel across TCs)
# ---------------------------------------------------------------------------
def graph_module_forward(x, mask_blocks, packed, *, out_channels, batch=None):
    del batch  # unused by GAT layers when norm=None (matches BasicGNN)
    w_stack, att_stack, bias_stack = packed
    num_layers, cp = w_stack.shape[0], w_stack.shape[2]
    num_blocks, nb, _ = mask_blocks.shape
    n, c_in = x.shape
    n_pad = num_blocks * nb

    x_pad = jnp.zeros((n_pad, cp), jnp.float32).at[:n, :c_in].set(x.astype(jnp.float32))

    out_pad = pl.pallas_call(
        functools.partial(gat_block_kernel, num_layers=num_layers),
        out_shape=jax.ShapeDtypeStruct((n_pad, cp), jnp.float32),
        grid=(num_blocks,),
        in_specs=[
            pl.BlockSpec((nb, cp), lambda b: (b, 0)),                   # x block
            pl.BlockSpec((1, nb, nb), lambda b: (b, 0, 0)),             # additive mask block
            pl.BlockSpec((num_layers, cp, cp), lambda b: (0, 0, 0)),    # weights (resident)
            pl.BlockSpec((num_layers, cp, 128), lambda b: (0, 0, 0)),   # [a_src|a_dst] (resident)
            pl.BlockSpec((num_layers, 1, cp), lambda b: (0, 0, 0)),     # bias (resident)
        ],
        out_specs=pl.BlockSpec((nb, cp), lambda b: (b, 0)),
        compiler_params=pltpu.CompilerParams(
            dimension_semantics=("parallel",)),          # shards blocks across v7x's 2 TCs
    )(x_pad, mask_blocks, w_stack, att_stack, bias_stack)

    return out_pad[:n, :out_channels]


# ---------------------------------------------------------------------------
# Pure-JAX reference.  matmul_dtype=f32 -> exact module semantics;
# matmul_dtype=bf16 -> numerics-matched to the kernel's bf16 MXU operands.
# ---------------------------------------------------------------------------
def gat_reference(params, x, adj, matmul_dtype=jnp.float32):
    def c(v):
        return v.astype(matmul_dtype).astype(jnp.float32)

    h = x.astype(jnp.float32)
    num_layers = len(params)
    for li, p in enumerate(params):
        hw = jnp.dot(c(h), c(p["w_t"]), preferred_element_type=jnp.float32)
        s_src = jnp.dot(c(hw), c(p["att_src"]), preferred_element_type=jnp.float32)
        s_dst = jnp.dot(c(hw), c(p["att_dst"]), preferred_element_type=jnp.float32)
        e = s_dst[:, None] + s_src[None, :]
        e = jnp.maximum(e, 0.2 * e)
        e = jnp.where(adj > 0, e, -1e30)
        m = jnp.max(e, axis=-1, keepdims=True)
        pe = jnp.where(adj > 0, jnp.exp(e - m), 0.0)
        alpha = pe / jnp.sum(pe, axis=-1, keepdims=True)
        h = jnp.dot(c(alpha), c(hw), preferred_element_type=jnp.float32) + p["bias"][None, :]
        if li < num_layers - 1:
            h = jnp.maximum(h, 0.0)
    return h


if __name__ == "__main__":
    # player pose graphs: 16 keypoints each, batched torch_geometric-style
    N_NODES = 16                       # nodes (pose keypoints) per graph
    IN_CH = 8
    HIDDEN = 16
    OUT_CH = 8
    NUM_LAYERS = 2
    NUM_GRAPHS = 16                    # e.g. players x frames batched into one call

    CP = 128                           # lane-dense padded channel width
    NB = 128                           # lane-dense nodes per kernel block (8 graphs/block)
    TOTAL_NODES = NUM_GRAPHS * N_NODES                      # 256
    NUM_BLOCKS = (TOTAL_NODES + NB - 1) // NB               # 2

    key = jax.random.PRNGKey(0)
    k_x, k_p = jax.random.split(key)

    x = jax.random.normal(k_x, (TOTAL_NODES, IN_CH), jnp.float32)

    # per-graph bidirectional ring i <-> (i+1) mod N, offset per graph (pyg batching)
    i = jnp.arange(N_NODES, dtype=jnp.int32)
    ring_src = jnp.concatenate([i, (i + 1) % N_NODES])
    ring_dst = jnp.concatenate([(i + 1) % N_NODES, i])
    offs = (jnp.arange(NUM_GRAPHS, dtype=jnp.int32) * N_NODES)[:, None]
    src = (ring_src[None, :] + offs).reshape(-1)
    dst = (ring_dst[None, :] + offs).reshape(-1)
    edge_index = jnp.stack([src, dst], axis=0)               # (2, 512)
    batch = jnp.repeat(jnp.arange(NUM_GRAPHS, dtype=jnp.int32), N_NODES)  # unused (norm=None)

    params = build_gat_params(k_p, IN_CH, HIDDEN, NUM_LAYERS, OUT_CH)
    packed = pack_params(params, CP)
    mask_blocks = build_block_masks(edge_index, NUM_BLOCKS, NB)   # built once, reused per call

    out = graph_module_forward(x, mask_blocks, packed, out_channels=OUT_CH, batch=batch)
    jax.block_until_ready(out)

    assert out.shape == (TOTAL_NODES, OUT_CH)
    assert bool(jnp.isfinite(out).all())

    adj_full = build_dense_adj(edge_index, TOTAL_NODES)
    # tight structural check against a bf16-matched reference (same operand rounding)
    ref_match = gat_reference(params, x, adj_full, matmul_dtype=jnp.bfloat16)
    err_match = float(jnp.max(jnp.abs(out - ref_match)))
    assert err_match < 2e-2, f"max abs err vs bf16-matched reference: {err_match}"
    # loose numerical sanity check against exact f32 semantics (bf16 matmul operands)
    ref_exact = gat_reference(params, x, adj_full, matmul_dtype=jnp.float32)
    err_exact = float(jnp.max(jnp.abs(out - ref_exact)))
    assert err_exact < 2.5e-1, f"max abs err vs exact f32 reference: {err_exact}"

    print("KERNEL_OK")
</pallas_src>

<mosaic_0001>
module attributes {stable_mosaic.version = 11 : i64} {
  func.func @gat_block_kernel(%arg0: i32, %arg1: memref<128x128xf32, #tpu.memory_space<vmem>>, %arg2: memref<1x128x128xbf16, #tpu.memory_space<vmem>>, %arg3: memref<2x128x128xbf16, #tpu.memory_space<vmem>>, %arg4: memref<2x128x128xbf16, #tpu.memory_space<vmem>>, %arg5: memref<2x1x128xf32, #tpu.memory_space<vmem>>, %arg6: memref<128x128xf32, #tpu.memory_space<vmem>>) attributes {dimension_semantics = [#tpu.dimension_semantics<parallel>], iteration_bounds = array<i64: 2>, scalar_prefetch = 0 : i64, scratch_operands = 0 : i64, tpu.core_type = #tpu.core_type<tc>, window_params = [{transform_indices = @transform_0, window_bounds = array<i64: 128, 128>}, {transform_indices = @transform_1, window_bounds = array<i64: 1, 128, 128>}, {pipeline_mode = #tpu.pipeline_mode<synchronous>, transform_indices = @transform_2, window_bounds = array<i64: 2, 128, 128>}, {pipeline_mode = #tpu.pipeline_mode<synchronous>, transform_indices = @transform_3, window_bounds = array<i64: 2, 128, 128>}, {pipeline_mode = #tpu.pipeline_mode<synchronous>, transform_indices = @transform_4, window_bounds = array<i64: 2, 1, 128>}, {transform_indices = @transform_5, window_bounds = array<i64: 128, 128>}]} {
    %c0 = arith.constant 0 : index
    %c0_0 = arith.constant 0 : index
    %0 = vector.load %arg1[%c0, %c0_0] : memref<128x128xf32, #tpu.memory_space<vmem>>, vector<128x128xf32>
    %c0_1 = arith.constant 0 : index
    %c0_2 = arith.constant 0 : index
    %c0_3 = arith.constant 0 : index
    %1 = vector.load %arg2[%c0_1, %c0_2, %c0_3] : memref<1x128x128xbf16, #tpu.memory_space<vmem>>, vector<1x128x128xbf16>
    %2 = vector.shape_cast %1 : vector<1x128x128xbf16> to vector<128x128xbf16>
    %3 = arith.extf %2 : vector<128x128xbf16> to vector<128x128xf32>
    %4 = arith.truncf %0 : vector<128x128xf32> to vector<128x128xbf16>
    %c0_4 = arith.constant 0 : index
    %c0_5 = arith.constant 0 : index
    %c0_6 = arith.constant 0 : index
    %5 = vector.load %arg3[%c0_4, %c0_5, %c0_6] : memref<2x128x128xbf16, #tpu.memory_space<vmem>>, vector<1x128x128xbf16>
    %6 = vector.shape_cast %5 : vector<1x128x128xbf16> to vector<128x128xbf16>
    %cst = arith.constant dense<0.000000e+00> : vector<128x128xf32>
    %7 = tpu.matmul %4, %6, %cst {dimension_numbers = #tpu.dot_dimension_numbers<[1], [0], [0], [1], [0, 0, 1, 1], [], []>} : vector<128x128xbf16>, vector<128x128xbf16>, vector<128x128xf32> -> vector<128x128xf32>
    %8 = arith.truncf %7 : vector<128x128xf32> to vector<128x128xbf16>
    %c0_7 = arith.constant 0 : index
    %c0_8 = arith.constant 0 : index
    %c0_9 = arith.constant 0 : index
    %9 = vector.load %arg4[%c0_7, %c0_8, %c0_9] : memref<2x128x128xbf16, #tpu.memory_space<vmem>>, vector<1x128x128xbf16>
    %10 = vector.shape_cast %9 : vector<1x128x128xbf16> to vector<128x128xbf16>
    %cst_10 = arith.constant dense<0.000000e+00> : vector<128x128xf32>
    %11 = tpu.matmul %8, %10, %cst_10 {dimension_numbers = #tpu.dot_dimension_numbers<[1], [0], [0], [1], [0, 0, 1, 1], [], []>} : vector<128x128xbf16>, vector<128x128xbf16>, vector<128x128xf32> -> vector<128x128xf32>
    %12 = vector.extract_strided_slice %11 {offsets = [0, 0], sizes = [128, 1], strides = [1, 1]} : vector<128x128xf32> to vector<128x1xf32>
    %13 = vector.extract_strided_slice %11 {offsets = [0, 1], sizes = [128, 1], strides = [1, 1]} : vector<128x128xf32> to vector<128x1xf32>
    %14 = tpu.transpose %12, [1, 0] : vector<128x1xf32> -> vector<1x128xf32>
    %15 = vector.broadcast %13 : vector<128x1xf32> to vector<128x128xf32>
    %16 = vector.broadcast %14 : vector<1x128xf32> to vector<128x128xf32>
    %17 = arith.addf %15, %16 : vector<128x128xf32>
    %cst_11 = arith.constant 2.000000e-01 : f32
    %18 = vector.broadcast %cst_11 : f32 to vector<128x128xf32>
    %19 = arith.mulf %18, %17 : vector<128x128xf32>
    %20 = arith.maximumf %17, %19 : vector<128x128xf32>
    %21 = arith.addf %20, %3 : vector<128x128xf32>
    %cst_12 = arith.constant dense<0xFF800000> : vector<128xf32>
    %22 = vector.multi_reduction <maximumf>, %21, %cst_12 [1] : vector<128x128xf32> to vector<128xf32>
    %23 = vector.shape_cast %22 : vector<128xf32> to vector<128x1xf32>
    %24 = vector.broadcast %23 : vector<128x1xf32> to vector<128x128xf32>
    %25 = arith.subf %21, %24 : vector<128x128xf32>
    %26 = math.exp %25 : vector<128x128xf32>
    %cst_13 = arith.constant dense<0.000000e+00> : vector<128xf32>
    %27 = vector.multi_reduction <add>, %26, %cst_13 [1] : vector<128x128xf32> to vector<128xf32>
    %28 = vector.shape_cast %27 : vector<128xf32> to vector<128x1xf32>
    %29 = tpu.reciprocal %28 {approx = true} : vector<128x1xf32> -> vector<128x1xf32>
    %30 = vector.broadcast %29 : vector<128x1xf32> to vector<128x128xf32>
    %31 = arith.mulf %26, %30 : vector<128x128xf32>
    %32 = arith.truncf %31 : vector<128x128xf32> to vector<128x128xbf16>
    %33 = arith.truncf %7 : vector<128x128xf32> to vector<128x128xbf16>
    %cst_14 = arith.constant dense<0.000000e+00> : vector<128x128xf32>
    %34 = tpu.matmul %32, %33, %cst_14 {dimension_numbers = #tpu.dot_dimension_numbers<[1], [0], [0], [1], [0, 0, 1, 1], [], []>} : vector<128x128xbf16>, vector<128x128xbf16>, vector<128x128xf32> -> vector<128x128xf32>
    %c0_15 = arith.constant 0 : index
    %c0_16 = arith.constant 0 : index
    %c0_17 = arith.constant 0 : index
    %35 = vector.load %arg5[%c0_15, %c0_16, %c0_17] : memref<2x1x128xf32, #tpu.memory_space<vmem>>, vector<1x1x128xf32>
    %36 = vector.shape_cast %35 : vector<1x1x128xf32> to vector<1x128xf32>
    %37 = vector.broadcast %36 : vector<1x128xf32> to vector<128x128xf32>
    %38 = arith.addf %34, %37 : vector<128x128xf32>
    %cst_18 = arith.constant 0.000000e+00 : f32
    %39 = vector.broadcast %cst_18 : f32 to vector<128x128xf32>
    %40 = arith.maximumf %38, %39 : vector<128x128xf32>
    %41 = arith.truncf %40 : vector<128x128xf32> to vector<128x128xbf16>
    %c1 = arith.constant 1 : index
    %c0_19 = arith.constant 0 : index
    %c0_20 = arith.constant 0 : index
    %42 = vector.load %arg3[%c1, %c0_19, %c0_20] : memref<2x128x128xbf16, #tpu.memory_space<vmem>>, vector<1x128x128xbf16>
    %43 = vector.shape_cast %42 : vector<1x128x128xbf16> to vector<128x128xbf16>
    %cst_21 = arith.constant dense<0.000000e+00> : vector<128x128xf32>
    %44 = tpu.matmul %41, %43, %cst_21 {dimension_numbers = #tpu.dot_dimension_numbers<[1], [0], [0], [1], [0, 0, 1, 1], [], []>} : vector<128x128xbf16>, vector<128x128xbf16>, vector<128x128xf32> -> vector<128x128xf32>
    %45 = arith.truncf %44 : vector<128x128xf32> to vector<128x128xbf16>
    %c1_22 = arith.constant 1 : index
    %c0_23 = arith.constant 0 : index
    %c0_24 = arith.constant 0 : index
    %46 = vector.load %arg4[%c1_22, %c0_23, %c0_24] : memref<2x128x128xbf16, #tpu.memory_space<vmem>>, vector<1x128x128xbf16>
    %47 = vector.shape_cast %46 : vector<1x128x128xbf16> to vector<128x128xbf16>
    %cst_25 = arith.constant dense<0.000000e+00> : vector<128x128xf32>
    %48 = tpu.matmul %45, %47, %cst_25 {dimension_numbers = #tpu.dot_dimension_numbers<[1], [0], [0], [1], [0, 0, 1, 1], [], []>} : vector<128x128xbf16>, vector<128x128xbf16>, vector<128x128xf32> -> vector<128x128xf32>
    %49 = vector.extract_strided_slice %48 {offsets = [0, 0], sizes = [128, 1], strides = [1, 1]} : vector<128x128xf32> to vector<128x1xf32>
    %50 = vector.extract_strided_slice %48 {offsets = [0, 1], sizes = [128, 1], strides = [1, 1]} : vector<128x128xf32> to vector<128x1xf32>
    %51 = tpu.transpose %49, [1, 0] : vector<128x1xf32> -> vector<1x128xf32>
    %52 = vector.broadcast %50 : vector<128x1xf32> to vector<128x128xf32>
    %53 = vector.broadcast %51 : vector<1x128xf32> to vector<128x128xf32>
    %54 = arith.addf %52, %53 : vector<128x128xf32>
    %cst_26 = arith.constant 2.000000e-01 : f32
    %55 = vector.broadcast %cst_26 : f32 to vector<128x128xf32>
    %56 = arith.mulf %55, %54 : vector<128x128xf32>
    %57 = arith.maximumf %54, %56 : vector<128x128xf32>
    %58 = arith.addf %57, %3 : vector<128x128xf32>
    %cst_27 = arith.constant dense<0xFF800000> : vector<128xf32>
    %59 = vector.multi_reduction <maximumf>, %58, %cst_27 [1] : vector<128x128xf32> to vector<128xf32>
    %60 = vector.shape_cast %59 : vector<128xf32> to vector<128x1xf32>
    %61 = vector.broadcast %60 : vector<128x1xf32> to vector<128x128xf32>
    %62 = arith.subf %58, %61 : vector<128x128xf32>
    %63 = math.exp %62 : vector<128x128xf32>
    %cst_28 = arith.constant dense<0.000000e+00> : vector<128xf32>
    %64 = vector.multi_reduction <add>, %63, %cst_28 [1] : vector<128x128xf32> to vector<128xf32>
    %65 = vector.shape_cast %64 : vector<128xf32> to vector<128x1xf32>
    %66 = tpu.reciprocal %65 {approx = true} : vector<128x1xf32> -> vector<128x1xf32>
    %67 = vector.broadcast %66 : vector<128x1xf32> to vector<128x128xf32>
    %68 = arith.mulf %63, %67 : vector<128x128xf32>
    %69 = arith.truncf %68 : vector<128x128xf32> to vector<128x128xbf16>
    %70 = arith.truncf %44 : vector<128x128xf32> to vector<128x128xbf16>
    %cst_29 = arith.constant dense<0.000000e+00> : vector<128x128xf32>
    %71 = tpu.matmul %69, %70, %cst_29 {dimension_numbers = #tpu.dot_dimension_numbers<[1], [0], [0], [1], [0, 0, 1, 1], [], []>} : vector<128x128xbf16>, vector<128x128xbf16>, vector<128x128xf32> -> vector<128x128xf32>
    %c1_30 = arith.constant 1 : index
    %c0_31 = arith.constant 0 : index
    %c0_32 = arith.constant 0 : index
    %72 = vector.load %arg5[%c1_30, %c0_31, %c0_32] : memref<2x1x128xf32, #tpu.memory_space<vmem>>, vector<1x1x128xf32>
    %73 = vector.shape_cast %72 : vector<1x1x128xf32> to vector<1x128xf32>
    %74 = vector.broadcast %73 : vector<1x128xf32> to vector<128x128xf32>
    %75 = arith.addf %71, %74 : vector<128x128xf32>
    %c0_33 = arith.constant 0 : index
    %c0_34 = arith.constant 0 : index
    %76 = vector.load %arg6[%c0_33, %c0_34] : memref<128x128xf32, #tpu.memory_space<vmem>>, vector<128x128xf32>
    tpu.vector_store %arg6[%c0_33, %c0_34], %75 {strides = array<i32>} : memref<128x128xf32, #tpu.memory_space<vmem>>, vector<128x128xf32>,
    return
  }
  func.func @transform_0(%arg0: i32) -> (i32, i32) {
    %c0_i32 = arith.constant 0 : i32
    %c0_i32_0 = arith.constant 0 : i32
    return %arg0, %c0_i32 : i32, i32
  }
  func.func @transform_1(%arg0: i32) -> (i32, i32, i32) {
    %c0_i32 = arith.constant 0 : i32
    %c0_i32_0 = arith.constant 0 : i32
    %c0_i32_1 = arith.constant 0 : i32
    return %arg0, %c0_i32, %c0_i32_0 : i32, i32, i32
  }
  func.func @transform_2(%arg0: i32) -> (i32, i32, i32) {
    %c0_i32 = arith.constant 0 : i32
    %c0_i32_0 = arith.constant 0 : i32
    %c0_i32_1 = arith.constant 0 : i32
    %c0_i32_2 = arith.constant 0 : i32
    return %c0_i32, %c0_i32_0, %c0_i32_1 : i32, i32, i32
  }
  func.func @transform_3(%arg0: i32) -> (i32, i32, i32) {
    %c0_i32 = arith.constant 0 : i32
    %c0_i32_0 = arith.constant 0 : i32
    %c0_i32_1 = arith.constant 0 : i32
    %c0_i32_2 = arith.constant 0 : i32
    return %c0_i32, %c0_i32_0, %c0_i32_1 : i32, i32, i32
  }
  func.func @transform_4(%arg0: i32) -> (i32, i32, i32) {
    %c0_i32 = arith.constant 0 : i32
    %c0_i32_0 = arith.constant 0 : i32
    %c0_i32_1 = arith.constant 0 : i32
    %c0_i32_2 = arith.constant 0 : i32
    return %c0_i32, %c0_i32_0, %c0_i32_1 : i32, i32, i32
  }
  func.func @transform_5(%arg0: i32) -> (i32, i32) {
    %c0_i32 = arith.constant 0 : i32
    %c0_i32_0 = arith.constant 0 : i32
    return %arg0, %c0_i32 : i32, i32
  }
}

</mosaic_0001>

<llo_original>
// kernel: tpu_custom_call.1
$region0: #{tpu_custom_call.1}
  #allocation0 [shape = 'u32[]', space=smem, size = 0x4, offset = 0x4, fixed_abs, tag = 'smem constant byte address 0x4 - core index']
  #allocation1 [shape = 'u32[72,128]{1,0:T(1,128)}', space=vmem, size = 0x9000, scoped, tag = 'internal scratch']
  %s0 = inlined_call_operand.hbm [shape: f32[256,128], index: 0, kind: input, shape index: {}]
  %s1 = inlined_call_operand.hbm [shape: bf16[2,128,128], index: 1, kind: input, shape index: {}]
  %s2 = inlined_call_operand.hbm [shape: bf16[2,128,128], index: 2, kind: input, shape index: {}]
  %s3 = inlined_call_operand.hbm [shape: bf16[2,128,128], index: 3, kind: input, shape index: {}]
  %s4 = inlined_call_operand.vmem [shape: f32[2,1,128], index: 4, kind: input, shape index: {}]
  %s5 = inlined_call_operand.hbm [shape: f32[256,128], index: 5, kind: output, shape index: {}]
  %s6 = sld [smem:[#allocation0]]
  $region69: #{tpu_custom_call.1} parent=0
    _
  %s8 = ssub.s32 1, %s6
  %s9 = scalar_select 0, %s8, %s6
  $region1: #{tpu_custom_call.1} parent=0
    #allocation2 [shape = 'u8[131072]{0}', space=vmem, size = 0x20000, scoped, tag = 'input window, operand 0']
    #allocation3 [shape = 's32[2]{0}', space=sflag, size = 0x8, scoped, tag = 'scoped memory for tpu_custom_call.1']
    #allocation4 [shape = 's32[2]{0}', space=sflag, size = 0x8, scoped, tag = 'scoped memory for tpu_custom_call.1']
    #allocation5 [shape = 'u8[65536]{0}', space=vmem, size = 0x10000, scoped, tag = 'input window, operand 1']
    #allocation6 [shape = 's32[2]{0}', space=sflag, size = 0x8, scoped, tag = 'scoped memory for tpu_custom_call.1']
    #allocation7 [shape = 'u8[65536]{0}', space=vmem, size = 0x10000, scoped, tag = 'input window, operand 2, single buffered']
    #allocation8 [shape = 'u8[65536]{0}', space=vmem, size = 0x10000, scoped, tag = 'input window, operand 3, single buffered']
    #allocation9 [shape = 's32[1]{0}', space=sflag, size = 0x4, scoped, tag = 'scoped memory for tpu_custom_call.1']
    #allocation10 [shape = 'u8[131072]{0}', space=vmem, size = 0x20000, scoped, tag = 'output window, operand 0']
    %10 = vsyncpa [#allocation3], 0
    %s11 = scalar_lea.sflag [#allocation3], 1
    %12 = vsyncpa %s11, 0
    %13 = vsyncpa [#allocation6], 0
    %s14 = scalar_lea.sflag [#allocation6], 1
    %15 = vsyncpa %s14, 0
    %16 = vsyncpa [#allocation9], 0
    %17 = vsyncpa [#allocation4], 0
    %s18 = scalar_lea.sflag [#allocation4], 1
    %19 = vsyncpa %s18, 0
    loop: start=0, step=1, limit=4
    $region2: #{tpu_custom_call.1} parent=1 // loop_pre_header
      _
    $region3: #{tpu_custom_call.1} parent=1 // loop_header
      %s21 = sphi 0, %s25
      %p22 = scmp.ge.s32.totalorder %s21, 4
      %s31 = sphi 0, %s33
      %s34 = sphi 0, %s31
      %s35 = sphi 0, %s34
      %s51 = sphi 0, %s35
      %s57 = sphi 0, %s59
      %s60 = sphi 0, %s57
      %s61 = sphi 0, %s60
      %s77 = sphi 0, %s61
      %s81 = sphi 0, %s81
      %s83 = sphi 0, %s81
      %s84 = sphi 0, %s83
      %s98 = sphi 0, %s84
      %s102 = sphi 0, %s102
      %s104 = sphi 0, %s102
      %s105 = sphi 0, %s104
      %s119 = sphi 0, %s105
      %s123 = sphi 0, %s123
      %s125 = sphi 0, %s123
      %s126 = sphi 0, %s125
      %s140 = sphi 0, %s126
      %s146 = sphi 0, %s148
      %s149 = sphi 0, %s146
      %s150 = sphi 0, %s149
      %s166 = sphi 0, %s150
    $region4: #{tpu_custom_call.1} parent=1 // loop_header_branch
      %24 = sbr.rel (%p22) target = $region8
    $region5: #{tpu_custom_call.1} parent=1 // loop_body
      %s26 = ssub.s32 %s21, 1
      %s27 = ssub.s32 %s21, 2
      %s28 = sadd.s32 %s21, 1
      %s29 = ssub.s32 %s21, %s28
      %p30 = scmp.eq.s32.totalorder %s29, 0
      %s32 = sadd.s32 %s31, 1
      %s33 = scalar_select %p30, %s31, %s32
      %p36 = pneg %p30
      %p37 = scmp.eq.s32.totalorder %s21, 1
      %p38 = por %p36, %p37
      %p39 = scmp.ne.s32.totalorder %s31, %s34
      %p40 = scmp.eq.s32.totalorder %s21, 0
      %p41 = por %p39, %p40
      %p42 = scmp.ne.s32.totalorder %s31, %s34
      %p43 = scmp.eq.s32.totalorder %s26, 1
      %p44 = por %p42, %p43
      %p45 = scmp.ne.s32.totalorder %s34, %s35
      %p46 = scmp.eq.s32.totalorder %s26, 0
      %p47 = por %p45, %p46
      %p48 = scmp.ne.s32.totalorder %s34, %s35
      %p49 = scmp.eq.s32.totalorder %s27, 1
      %p50 = por %p48, %p49
      %p52 = scmp.ne.s32.totalorder %s35, %s51
      %p53 = scmp.eq.s32.totalorder %s27, 0
      %p54 = por %p52, %p53
      %s55 = ssub.s32 %s21, %s28
      %p56 = scmp.eq.s32.totalorder %s55, 0
      %s58 = sadd.s32 %s57, 1
      %s59 = scalar_select %p56, %s57, %s58
      %p62 = pneg %p56
      %p63 = scmp.eq.s32.totalorder %s21, 1
      %p64 = por %p62, %p63
      %p65 = scmp.ne.s32.totalorder %s57, %s60
      %p66 = scmp.eq.s32.totalorder %s21, 0
      %p67 = por %p65, %p66
      %p68 = scmp.ne.s32.totalorder %s57, %s60
      %p69 = scmp.eq.s32.totalorder %s26, 1
      %p70 = por %p68, %p69
      %p71 = scmp.ne.s32.totalorder %s60, %s61
      %p72 = scmp.eq.s32.totalorder %s26, 0
      %p73 = por %p71, %p72
      %p74 = scmp.ne.s32.totalorder %s60, %s61
      %p75 = scmp.eq.s32.totalorder %s27, 1
      %p76 = por %p74, %p75
      %p78 = scmp.ne.s32.totalorder %s61, %s77
      %p79 = scmp.eq.s32.totalorder %s27, 0
      %p80 = por %p78, %p79
      %s82 = sadd.s32 %s81, 1
      %p85 = scmp.eq.s32.totalorder %s21, 1
      %p86 = scmp.ne.s32.totalorder %s81, %s83
      %p87 = scmp.eq.s32.totalorder %s21, 0
      %p88 = por %p86, %p87
      %p89 = scmp.ne.s32.totalorder %s81, %s83
      %p90 = scmp.eq.s32.totalorder %s26, 1
      %p91 = por %p89, %p90
      %p92 = scmp.ne.s32.totalorder %s83, %s84
      %p93 = scmp.eq.s32.totalorder %s26, 0
      %p94 = por %p92, %p93
      %p95 = scmp.ne.s32.totalorder %s83, %s84
      %p96 = scmp.eq.s32.totalorder %s27, 1
      %p97 = por %p95, %p96
      %p99 = scmp.ne.s32.totalorder %s84, %s98
      %p100 = scmp.eq.s32.totalorder %s27, 0
      %p101 = por %p99, %p100
      %s103 = sadd.s32 %s102, 1
      %p106 = scmp.eq.s32.totalorder %s21, 1
      %p107 = scmp.ne.s32.totalorder %s102, %s104
      %p108 = scmp.eq.s32.totalorder %s21, 0
      %p109 = por %p107, %p108
      %p110 = scmp.ne.s32.totalorder %s102, %s104
      %p111 = scmp.eq.s32.totalorder %s26, 1
      %p112 = por %p110, %p111
      %p113 = scmp.ne.s32.totalorder %s104, %s105
      %p114 = scmp.eq.s32.totalorder %s26, 0
      %p115 = por %p113, %p114
      %p116 = scmp.ne.s32.totalorder %s104, %s105
      %p117 = scmp.eq.s32.totalorder %s27, 1
      %p118 = por %p116, %p117
      %p120 = scmp.ne.s32.totalorder %s105, %s119
      %p121 = scmp.eq.s32.totalorder %s27, 0
      %p122 = por %p120, %p121
      %s124 = sadd.s32 %s123, 1
      %p127 = scmp.eq.s32.totalorder %s21, 1
      %p128 = scmp.ne.s32.totalorder %s123, %s125
      %p129 = scmp.eq.s32.totalorder %s21, 0
      %p130 = por %p128, %p129
      %p131 = scmp.ne.s32.totalorder %s123, %s125
      %p132 = scmp.eq.s32.totalorder %s26, 1
      %p133 = por %p131, %p132
      %p134 = scmp.ne.s32.totalorder %s125, %s126
      %p135 = scmp.eq.s32.totalorder %s26, 0
      %p136 = por %p134, %p135
      %p137 = scmp.ne.s32.totalorder %s125, %s126
      %p138 = scmp.eq.s32.totalorder %s27, 1
      %p139 = por %p137, %p138
      %p141 = scmp.ne.s32.totalorder %s126, %s140
      %p142 = scmp.eq.s32.totalorder %s27, 0
      %p143 = por %p141, %p142
      %s144 = ssub.s32 %s21, %s28
      %p145 = scmp.eq.s32.totalorder %s144, 0
      %s147 = sadd.s32 %s146, 1
      %s148 = scalar_select %p145, %s146, %s147
      %p151 = pneg %p145
      %p152 = scmp.eq.s32.totalorder %s21, 1
      %p153 = por %p151, %p152
      %p154 = scmp.ne.s32.totalorder %s146, %s149
      %p155 = scmp.eq.s32.totalorder %s21, 0
      %p156 = por %p154, %p155
      %p157 = scmp.ne.s32.totalorder %s146, %s149
      %p158 = scmp.eq.s32.totalorder %s26, 1
      %p159 = por %p157, %p158
      %p160 = scmp.ne.s32.totalorder %s149, %s150
      %p161 = scmp.eq.s32.totalorder %s26, 0
      %p162 = por %p160, %p161
      %p163 = scmp.ne.s32.totalorder %s149, %s150
      %p164 = scmp.eq.s32.totalorder %s27, 1
      %p165 = por %p163, %p164
      %p167 = scmp.ne.s32.totalorder %s150, %s166
      %p168 = scmp.eq.s32.totalorder %s27, 0
      %p169 = por %p167, %p168
      %p170 = scmp.le.s32.totalorder 1, %s21
      %p171 = scmp.lt.s32.totalorder %s21, 3
      %p172 = pnand %p170, %p171
      %p173 = pneg %p172
      // Predicated region
      $region9: #{tpu_custom_call.1} parent=5 // pred_check
        _
      $region10: #{tpu_custom_call.1} parent=5 // pred_check_branch
        %175 = sbr.rel (%p172) target = $region12
      $region11: #{tpu_custom_call.1} parent=5 // pred_region
        %s176 = ssub.s32 %s21, 1
        // Predicated region
        $region13: #{tpu_custom_call.1} parent=11 // pred_check
          %p177 = pneg %p94
        $region14: #{tpu_custom_call.1} parent=11 // pred_check_branch
          %179 = sbr.rel (%p177) target = $region16
        $region15: #{tpu_custom_call.1} parent=11 // pred_region
          %181 = vsyncadd [#allocation6], 0
          %s182 = sshll.u32 %s2, 4
          %s183 = int_to_ptr.hbm [resolvable:$true] %s182
          %s184 = sshll.u32 [#allocation7], 4
          %s185 = int_to_ptr.vmem [resolvable:$true] %s184
          %190 = dma.hbm_to_vmem [thread:$0]  %s183, 2048, %s185, [#allocation6], 64, 64, 4
        $region16: #{tpu_custom_call.1} parent=11 // pred_fallthru
          _
        // Predicated region
        $region17: #{tpu_custom_call.1} parent=11 // pred_check
          %p191 = pneg %p115
        $region18: #{tpu_custom_call.1} parent=11 // pred_check_branch
          %193 = sbr.rel (%p191) target = $region20
        $region19: #{tpu_custom_call.1} parent=11 // pred_region
          %195 = vsyncadd [#allocation9], 0
          %s196 = sshll.u32 %s3, 4
          %s197 = int_to_ptr.hbm [resolvable:$true] %s196
          %s198 = sshll.u32 [#allocation8], 4
          %s199 = int_to_ptr.vmem [resolvable:$true] %s198
          %204 = dma.hbm_to_vmem [thread:$0]  %s197, 2048, %s199, [#allocation9], 64, 64, 4
        $region20: #{tpu_custom_call.1} parent=11 // pred_fallthru
          _
        // Predicated region
        $region21: #{tpu_custom_call.1} parent=11 // pred_check
          %p205 = pneg %p136
        $region22: #{tpu_custom_call.1} parent=11 // pred_check_branch
          %207 = sbr.rel (%p205) target = $region24
        $region23: #{tpu_custom_call.1} parent=11 // pred_region
          _
        $region24: #{tpu_custom_call.1} parent=11 // pred_fallthru
          _
      $region12: #{tpu_custom_call.1} parent=5 // pred_fallthru
        _
      %p208 = scmp.lt.s32.totalorder %s21, 2
      // Predicated region
      $region25: #{tpu_custom_call.1} parent=5 // pred_check
        %p209 = pneg %p208
      $region26: #{tpu_custom_call.1} parent=5 // pred_check_branch
        %211 = sbr.rel (%p209) target = $region28
      $region27: #{tpu_custom_call.1} parent=5 // pred_region
        // Predicated region
        $region29: #{tpu_custom_call.1} parent=27 // pred_check
          %p212 = pneg %p41
        $region30: #{tpu_custom_call.1} parent=27 // pred_check_branch
          %214 = sbr.rel (%p212) target = $region32
        $region31: #{tpu_custom_call.1} parent=27 // pred_region
          %s215 = sand.u32 %s31, 1
          %s216 = scalar_lea.sflag [#allocation3], %s215
          %s217 = sand.u32 %s31, 1
          %s218 = smul.addr %s217, 128
          %s219 = scalar_lea.vmem [#allocation2], %s218
          %s220 = smul.u32 16, %s21
          %222 = vsyncadd %s216, 0
          %s223 = smul.addr %s220, 8
          %s224 = scalar_lea.hbm %s0, %s223
          %s225 = sshll.u32 %s224, 4
          %s226 = int_to_ptr.hbm [resolvable:$true] %s225
          %s227 = sshll.u32 %s219, 4
          %s228 = int_to_ptr.vmem [resolvable:$true] %s227
          %233 = dma.hbm_to_vmem [thread:$0]  %s226, 2048, %s228, %s216, 128, 128, 8
        $region32: #{tpu_custom_call.1} parent=27 // pred_fallthru
          _
        // Predicated region
        $region33: #{tpu_custom_call.1} parent=27 // pred_check
          %p234 = pneg %p67
        $region34: #{tpu_custom_call.1} parent=27 // pred_check_branch
          %236 = sbr.rel (%p234) target = $region36
        $region35: #{tpu_custom_call.1} parent=27 // pred_region
          %s237 = sand.u32 %s21, 1
          %s238 = scalar_lea.sflag [#allocation6], %s237
          %s239 = sand.u32 %s57, 1
          %s240 = smul.addr %s239, 64
          %s241 = scalar_lea.vmem [#allocation5], %s240
          %243 = vsyncadd %s238, 0
          %s244 = smul.addr %s21, 16
          %s245 = smul.addr %s244, 4
          %s246 = scalar_lea.hbm %s1, %s245
          %s247 = sshll.u32 %s246, 4
          %s248 = int_to_ptr.hbm [resolvable:$true] %s247
          %s249 = sshll.u32 %s241, 4
          %s250 = int_to_ptr.vmem [resolvable:$true] %s249
          %255 = dma.hbm_to_vmem [thread:$0]  %s248, 1024, %s250, %s238, 64, 64, 4
        $region36: #{tpu_custom_call.1} parent=27 // pred_fallthru
          _
      $region28: #{tpu_custom_call.1} parent=5 // pred_fallthru
        _
      %p256 = scmp.le.s32.totalorder 1, %s21
      %p257 = scmp.lt.s32.totalorder %s21, 3
      %p258 = pnand %p256, %p257
      %p259 = pneg %p258
      // Predicated region
      $region37: #{tpu_custom_call.1} parent=5 // pred_check
        _
      $region38: #{tpu_custom_call.1} parent=5 // pred_check_branch
        %261 = sbr.rel (%p258) target = $region40
      $region39: #{tpu_custom_call.1} parent=5 // pred_region
        %s262 = ssub.s32 %s21, 1
        %s263 = sand.u32 %s34, 1
        %s264 = scalar_lea.sflag [#allocation3], %s263
        %s265 = sand.u32 %s34, 1
        %s266 = smul.addr %s265, 128
        %s267 = scalar_lea.vmem [#allocation2], %s266
        // Predicated region
        $region41: #{tpu_custom_call.1} parent=39 // pred_check
          %p268 = pneg %p47
        $region42: #{tpu_custom_call.1} parent=39 // pred_check_branch
          %270 = sbr.rel (%p268) target = $region44
        $region43: #{tpu_custom_call.1} parent=39 // pred_region
          %272 = dma.done %s264, 2048
        $region44: #{tpu_custom_call.1} parent=39 // pred_fallthru
          _
        %s273 = sand.u32 %s26, 1
        %s274 = scalar_lea.sflag [#allocation6], %s273
        %s275 = sand.u32 %s60, 1
        %s276 = smul.addr %s275, 64
        %s277 = scalar_lea.vmem [#allocation5], %s276
        // Predicated region
        $region45: #{tpu_custom_call.1} parent=39 // pred_check
          %p278 = pneg %p73
        $region46: #{tpu_custom_call.1} parent=39 // pred_check_branch
          %280 = sbr.rel (%p278) target = $region48
        $region47: #{tpu_custom_call.1} parent=39 // pred_region
          %282 = dma.done %s274, 1024
        $region48: #{tpu_custom_call.1} parent=39 // pred_fallthru
          _
        // Predicated region
        $region49: #{tpu_custom_call.1} parent=39 // pred_check
          %p283 = pneg %p94
        $region50: #{tpu_custom_call.1} parent=39 // pred_check_branch
          %285 = sbr.rel (%p283) target = $region52
        $region51: #{tpu_custom_call.1} parent=39 // pred_region
          %287 = dma.done [#allocation6], 2048
        $region52: #{tpu_custom_call.1} parent=39 // pred_fallthru
          _
        // Predicated region
        $region53: #{tpu_custom_call.1} parent=39 // pred_check
          %p288 = pneg %p115
        $region54: #{tpu_custom_call.1} parent=39 // pred_check_branch
          %290 = sbr.rel (%p288) target = $region56
        $region55: #{tpu_custom_call.1} parent=39 // pred_region
          %292 = dma.done [#allocation9], 2048
        $region56: #{tpu_custom_call.1} parent=39 // pred_fallthru
          _
        %s293 = sand.u32 %s34, 1
        %s294 = scalar_lea.sflag [#allocation3], %s293
        %s295 = sand.u32 %s34, 1
        %s296 = smul.addr %s295, 128
        %s297 = scalar_lea.vmem [#allocation2], %s296
        %p298 = pneg %p47
        %p299 = pneg %p44
        %s300 = sand.u32 %s26, 1
        %s301 = scalar_lea.sflag [#allocation6], %s300
        %s302 = sand.u32 %s60, 1
        %s303 = smul.addr %s302, 64
        %s304 = scalar_lea.vmem [#allocation5], %s303
        %p305 = pneg %p73
        %p306 = pneg %p70
        %p307 = pneg %p94
        %p308 = pneg %p91
        %p309 = pneg %p115
        %p310 = pneg %p112
        %p311 = pneg %p136
        %p312 = pneg %p133
        %p313 = pneg %p162
        %p314 = pneg %p159
        %s315 = sand.u32 %s149, 1
        %s316 = scalar_lea.sflag [#allocation4], %s315
        %s317 = sand.u32 %s149, 1
        %s318 = smul.addr %s317, 128
        %s319 = scalar_lea.vmem [#allocation10], %s318
        %s320 = smul.u32 16, %s26
        %s321 = smul.u32 16, %s26
        %v322 = vld [vmem:[%s267] sm:$0xff]
        %v323 = vld [vmem:[%s267 + $0x8] sm:$0xff]
        %v324 = vld [vmem:[%s267 + $0x10] sm:$0xff]
        %v325 = vld [vmem:[%s267 + $0x18] sm:$0xff]
        %v326 = vld [vmem:[%s267 + $0x20] sm:$0xff]
        %v327 = vld [vmem:[%s267 + $0x28] sm:$0xff]
        %v328 = vld [vmem:[%s267 + $0x30] sm:$0xff]
        %v329 = vld [vmem:[%s267 + $0x38] sm:$0xff]
        %v330 = vld [vmem:[%s267 + $0x40] sm:$0xff]
        %v331 = vld [vmem:[%s267 + $0x48] sm:$0xff]
        %v332 = vld [vmem:[%s267 + $0x50] sm:$0xff]
        %v333 = vld [vmem:[%s267 + $0x58] sm:$0xff]
        %v334 = vld [vmem:[%s267 + $0x60] sm:$0xff]
        %v335 = vld [vmem:[%s267 + $0x68] sm:$0xff]
        %v336 = vld [vmem:[%s267 + $0x70] sm:$0xff]
        %v337 = vld [vmem:[%s267 + $0x78] sm:$0xff]
        %v338 = vld [vmem:[%s277] sm:$0xf]
        %v339 = vld [vmem:[%s277 + $0x4] sm:$0xf]
        %v340 = vld [vmem:[%s277 + $0x8] sm:$0xf]
        %v341 = vld [vmem:[%s277 + $0xc] sm:$0xf]
        %v342 = vld [vmem:[%s277 + $0x10] sm:$0xf]
        %v343 = vld [vmem:[%s277 + $0x14] sm:$0xf]
        %v344 = vld [vmem:[%s277 + $0x18] sm:$0xf]
        %v345 = vld [vmem:[%s277 + $0x1c] sm:$0xf]
        %v346 = vld [vmem:[%s277 + $0x20] sm:$0xf]
        %v347 = vld [vmem:[%s277 + $0x24] sm:$0xf]
        %v348 = vld [vmem:[%s277 + $0x28] sm:$0xf]
        %v349 = vld [vmem:[%s277 + $0x2c] sm:$0xf]
        %v350 = vld [vmem:[%s277 + $0x30] sm:$0xf]
        %v351 = vld [vmem:[%s277 + $0x34] sm:$0xf]
        %v352 = vld [vmem:[%s277 + $0x38] sm:$0xf]
        %v353 = vld [vmem:[%s277 + $0x3c] sm:$0xf]
        %v354 = vunpack.c.l.bf16 %v338
        %v355 = vunpack.c.l.bf16 %v339
        %v356 = vunpack.c.l.bf16 %v340
        %v357 = vunpack.c.l.bf16 %v341
        %v358 = vunpack.c.l.bf16 %v342
        %v359 = vunpack.c.l.bf16 %v343
        %v360 = vunpack.c.l.bf16 %v344
        %v361 = vunpack.c.l.bf16 %v345
        %v362 = vunpack.c.l.bf16 %v346
        %v363 = vunpack.c.l.bf16 %v347
        %v364 = vunpack.c.l.bf16 %v348
        %v365 = vunpack.c.l.bf16 %v349
        %v366 = vunpack.c.l.bf16 %v350
        %v367 = vunpack.c.l.bf16 %v351
        %v368 = vunpack.c.l.bf16 %v352
        %v369 = vunpack.c.l.bf16 %v353
        %v370 = vpack.c.bf16 %v323, %v322
        %v371 = vpack.c.bf16 %v325, %v324
        %v372 = vpack.c.bf16 %v327, %v326
        %v373 = vpack.c.bf16 %v329, %v328
        %v374 = vpack.c.bf16 %v331, %v330
        %v375 = vpack.c.bf16 %v333, %v332
        %v376 = vpack.c.bf16 %v335, %v334
        %v377 = vpack.c.bf16 %v337, %v336
        %v378 = vld [vmem:[#allocation7] sm:$0xf]
        %v379 = vld [vmem:[#allocation7 + $0x4] sm:$0xf]
        %v380 = vld [vmem:[#allocation7 + $0x8] sm:$0xf]
        %v381 = vld [vmem:[#allocation7 + $0xc] sm:$0xf]
        %v382 = vld [vmem:[#allocation7 + $0x10] sm:$0xf]
        %v383 = vld [vmem:[#allocation7 + $0x14] sm:$0xf]
        %v384 = vld [vmem:[#allocation7 + $0x18] sm:$0xf]
        %v385 = vld [vmem:[#allocation7 + $0x1c] sm:$0xf]
        %v386 = vld [vmem:[#allocation7 + $0x20] sm:$0xf]
        %v387 = vld [vmem:[#allocation7 + $0x24] sm:$0xf]
        %v388 = vld [vmem:[#allocation7 + $0x28] sm:$0xf]
        %v389 = vld [vmem:[#allocation7 + $0x2c] sm:$0xf]
        %v390 = vld [vmem:[#allocation7 + $0x30] sm:$0xf]
        %v391 = vld [vmem:[#allocation7 + $0x34] sm:$0xf]
        %v392 = vld [vmem:[#allocation7 + $0x38] sm:$0xf]
        %v393 = vld [vmem:[#allocation7 + $0x3c] sm:$0xf]
        %v410 = vunpack.c.l.b16 %v378
        %v411 = vunpack.c.l.b16 %v379
        %v412 = vunpack.c.l.b16 %v380
        %v413 = vunpack.c.l.b16 %v381
        %v414 = vunpack.c.l.b16 %v382
        %v415 = vunpack.c.l.b16 %v383
        %v416 = vunpack.c.l.b16 %v384
        %v417 = vunpack.c.l.b16 %v385
        %v418 = vunpack.c.l.b16 %v386
        %v419 = vunpack.c.l.b16 %v387
        %v420 = vunpack.c.l.b16 %v388
        %v421 = vunpack.c.l.b16 %v389
        %v422 = vunpack.c.l.b16 %v390
        %v423 = vunpack.c.l.b16 %v391
        %v424 = vunpack.c.l.b16 %v392
        %v425 = vunpack.c.l.b16 %v393
        %v426 = vpack.c.b16 %v411, %v410
        %v427 = vpack.c.b16 %v413, %v412
        %v428 = vpack.c.b16 %v415, %v414
        %v429 = vpack.c.b16 %v417, %v416
        %v430 = vpack.c.b16 %v419, %v418
        %v431 = vpack.c.b16 %v421, %v420
        %v432 = vpack.c.b16 %v423, %v422
        %v433 = vpack.c.b16 %v425, %v424
        %442 = vmatpush.bf16.msra.mxu0 %v433
        %443 = vmatpush.bf16.msra.mxu0 %v432
        %444 = vmatpush.bf16.msra.mxu0 %v431
        %445 = vmatpush.bf16.msra.mxu0 %v430
        %446 = vmatpush.bf16.msra.mxu0 %v429
        %447 = vmatpush.bf16.msra.mxu0 %v428
        %448 = vmatpush.bf16.msra.mxu0 %v427
        %449 = vmatpush.bf16.msra.mxu0 %v426
        %450 = vmatmul.bf16.gmra.mxu0 %v370
        %v451 = vpop.f32.mrf.mxu0
        %v452 = vadd.f32 0.0, %v451
        %v453 = vpop.f32.mrf.mxu0
        %v454 = vadd.f32 0.0, %v453
        %455 = vmatmul.bf16.gmra.mxu0 %v371
        %v456 = vpop.f32.mrf.mxu0
        %v457 = vadd.f32 0.0, %v456
        %v458 = vpop.f32.mrf.mxu0
        %v459 = vadd.f32 0.0, %v458
        %460 = vmatmul.bf16.gmra.mxu0 %v372
        %v461 = vpop.f32.mrf.mxu0
        %v462 = vadd.f32 0.0, %v461
        %v463 = vpop.f32.mrf.mxu0
        %v464 = vadd.f32 0.0, %v463
        %465 = vmatmul.bf16.gmra.mxu0 %v373
        %v466 = vpop.f32.mrf.mxu0
        %v467 = vadd.f32 0.0, %v466
        %v468 = vpop.f32.mrf.mxu0
        %v469 = vadd.f32 0.0, %v468
        %470 = vmatmul.bf16.gmra.mxu0 %v374
        %v471 = vpop.f32.mrf.mxu0
        %v472 = vadd.f32 0.0, %v471
        %v473 = vpop.f32.mrf.mxu0
        %v474 = vadd.f32 0.0, %v473
        %475 = vmatmul.bf16.gmra.mxu0 %v375
        %v476 = vpop.f32.mrf.mxu0
        %v477 = vadd.f32 0.0, %v476
        %v478 = vpop.f32.mrf.mxu0
        %v479 = vadd.f32 0.0, %v478
        %480 = vmatmul.bf16.gmra.mxu0 %v376
        %v481 = vpop.f32.mrf.mxu0
        %v482 = vadd.f32 0.0, %v481
        %v483 = vpop.f32.mrf.mxu0
        %v484 = vadd.f32 0.0, %v483
        %485 = vmatmul.bf16.gmra.mxu0 %v377
        %v486 = vpop.f32.mrf.mxu0
        %v487 = vadd.f32 0.0, %v486
        %v488 = vpop.f32.mrf.mxu0
        %v489 = vadd.f32 0.0, %v488
        %490 = vdwg.mxu0
        %v491 = vpack.c.bf16 %v454, %v452
        %v492 = vpack.c.bf16 %v459, %v457
        %v493 = vpack.c.bf16 %v464, %v462
        %v494 = vpack.c.bf16 %v469, %v467
        %v495 = vpack.c.bf16 %v474, %v472
        %v496 = vpack.c.bf16 %v479, %v477
        %v497 = vpack.c.bf16 %v484, %v482
        %v498 = vpack.c.bf16 %v489, %v487
        %v499 = vld [vmem:[#allocation8] sm:$0xf]
        %v500 = vld [vmem:[#allocation8 + $0x4] sm:$0xf]
        %v501 = vld [vmem:[#allocation8 + $0x8] sm:$0xf]
        %v502 = vld [vmem:[#allocation8 + $0xc] sm:$0xf]
        %v503 = vld [vmem:[#allocation8 + $0x10] sm:$0xf]
        %v504 = vld [vmem:[#allocation8 + $0x14] sm:$0xf]
        %v505 = vld [vmem:[#allocation8 + $0x18] sm:$0xf]
        %v506 = vld [vmem:[#allocation8 + $0x1c] sm:$0xf]
        %v507 = vld [vmem:[#allocation8 + $0x20] sm:$0xf]
        %v508 = vld [vmem:[#allocation8 + $0x24] sm:$0xf]
        %v509 = vld [vmem:[#allocation8 + $0x28] sm:$0xf]
        %v510 = vld [vmem:[#allocation8 + $0x2c] sm:$0xf]
        %v511 = vld [vmem:[#allocation8 + $0x30] sm:$0xf]
        %v512 = vld [vmem:[#allocation8 + $0x34] sm:$0xf]
        %v513 = vld [vmem:[#allocation8 + $0x38] sm:$0xf]
        %v514 = vld [vmem:[#allocation8 + $0x3c] sm:$0xf]
        %v531 = vunpack.c.l.b16 %v499
        %v532 = vunpack.c.l.b16 %v500
        %v533 = vunpack.c.l.b16 %v501
        %v534 = vunpack.c.l.b16 %v502
        %v535 = vunpack.c.l.b16 %v503
        %v536 = vunpack.c.l.b16 %v504
        %v537 = vunpack.c.l.b16 %v505
        %v538 = vunpack.c.l.b16 %v506
        %v539 = vunpack.c.l.b16 %v507
        %v540 = vunpack.c.l.b16 %v508
        %v541 = vunpack.c.l.b16 %v509
        %v542 = vunpack.c.l.b16 %v510
        %v543 = vunpack.c.l.b16 %v511
        %v544 = vunpack.c.l.b16 %v512
        %v545 = vunpack.c.l.b16 %v513
        %v546 = vunpack.c.l.b16 %v514
        %v547 = vpack.c.b16 %v532, %v531
        %v548 = vpack.c.b16 %v534, %v533
        %v549 = vpack.c.b16 %v536, %v535
        %v550 = vpack.c.b16 %v538, %v537
        %v551 = vpack.c.b16 %v540, %v539
        %v552 = vpack.c.b16 %v542, %v541
        %v553 = vpack.c.b16 %v544, %v543
        %v554 = vpack.c.b16 %v546, %v545
        %563 = vmatpush.bf16.msra.mxu0 %v554
        %564 = vmatpush.bf16.msra.mxu0 %v553
        %565 = vmatpush.bf16.msra.mxu0 %v552
        %566 = vmatpush.bf16.msra.mxu0 %v551
        %567 = vmatpush.bf16.msra.mxu0 %v550
        %568 = vmatpush.bf16.msra.mxu0 %v549
        %569 = vmatpush.bf16.msra.mxu0 %v548
        %570 = vmatpush.bf16.msra.mxu0 %v547
        %571 = vmatmul.bf16.gmra.mxu0 %v491
        %v572 = vpop.f32.mrf.mxu0
        %v573 = vadd.f32 0.0, %v572
        %v574 = vpop.f32.mrf.mxu0
        %v575 = vadd.f32 0.0, %v574
        %576 = vmatmul.bf16.gmra.mxu0 %v492
        %v577 = vpop.f32.mrf.mxu0
        %v578 = vadd.f32 0.0, %v577
        %v579 = vpop.f32.mrf.mxu0
        %v580 = vadd.f32 0.0, %v579
        %581 = vmatmul.bf16.gmra.mxu0 %v493
        %v582 = vpop.f32.mrf.mxu0
        %v583 = vadd.f32 0.0, %v582
        %v584 = vpop.f32.mrf.mxu0
        %v585 = vadd.f32 0.0, %v584
        %586 = vmatmul.bf16.gmra.mxu0 %v494
        %v587 = vpop.f32.mrf.mxu0
        %v588 = vadd.f32 0.0, %v587
        %v589 = vpop.f32.mrf.mxu0
        %v590 = vadd.f32 0.0, %v589
        %591 = vmatmul.bf16.gmra.mxu0 %v495
        %v592 = vpop.f32.mrf.mxu0
        %v593 = vadd.f32 0.0, %v592
        %v594 = vpop.f32.mrf.mxu0
        %v595 = vadd.f32 0.0, %v594
        %596 = vmatmul.bf16.gmra.mxu0 %v496
        %v597 = vpop.f32.mrf.mxu0
        %v598 = vadd.f32 0.0, %v597
        %v599 = vpop.f32.mrf.mxu0
        %v600 = vadd.f32 0.0, %v599
        %601 = vmatmul.bf16.gmra.mxu0 %v497
        %v602 = vpop.f32.mrf.mxu0
        %v603 = vadd.f32 0.0, %v602
        %v604 = vpop.f32.mrf.mxu0
        %v605 = vadd.f32 0.0, %v604
        %606 = vmatmul.bf16.gmra.mxu0 %v498
        %v607 = vpop.f32.mrf.mxu0
        %v608 = vadd.f32 0.0, %v607
        %v609 = vpop.f32.mrf.mxu0
        %v610 = vadd.f32 0.0, %v609
        %611 = vdwg.mxu0
        %612 = vxpose.xlu0.b32.start [1/16] %v573, 128
        %613 = vxpose.xlu0.b32.cont [2/16] %v575, 128
        %614 = vxpose.xlu0.b32.cont [3/16] %v578, 128
        %615 = vxpose.xlu0.b32.cont [4/16] %v580, 128
        %616 = vxpose.xlu0.b32.cont [5/16] %v583, 128
        %617 = vxpose.xlu0.b32.cont [6/16] %v585, 128
        %618 = vxpose.xlu0.b32.cont [7/16] %v588, 128
        %619 = vxpose.xlu0.b32.cont [8/16] %v590, 128
        %620 = vxpose.xlu0.b32.cont [9/16] %v593, 128
        %621 = vxpose.xlu0.b32.cont [10/16] %v595, 128
        %622 = vxpose.xlu0.b32.cont [11/16] %v598, 128
        %623 = vxpose.xlu0.b32.cont [12/16] %v600, 128
        %624 = vxpose.xlu0.b32.cont [13/16] %v603, 128
        %625 = vxpose.xlu0.b32.cont [14/16] %v605, 128
        %626 = vxpose.xlu0.b32.cont [15/16] %v608, 128
        %627 = vxpose.xlu0.b32.end [16/16] %v610, 128
        %v628 = vpop.trf.xlu0
        %v629 = vpop.trf.xlu0
        %v630 = vpop.trf.xlu0
        %v631 = vpop.trf.xlu0
        %v632 = vpop.trf.xlu0
        %v633 = vpop.trf.xlu0
        %v634 = vpop.trf.xlu0
        %v635 = vpop.trf.xlu0
        %v636 = vpop.trf.xlu0
        %v637 = vpop.trf.xlu0
        %v638 = vpop.trf.xlu0
        %v639 = vpop.trf.xlu0
        %v640 = vpop.trf.xlu0
        %v641 = vpop.trf.xlu0
        %v642 = vpop.trf.xlu0
        %v643 = vpop.trf.xlu0
        %645 = vset.pattern.permute.xlu0 1
        %646 = vperm.xlu0 %645, %v573
        %v647 = vpop.permute.xlu0 %646
        %650 = vset.pattern.permute.xlu0 1
        %651 = vperm.xlu0 %650, %v575
        %v652 = vpop.permute.xlu0 %651
        %655 = vset.pattern.permute.xlu0 1
        %656 = vperm.xlu0 %655, %v578
        %v657 = vpop.permute.xlu0 %656
        %660 = vset.pattern.permute.xlu0 1
        %661 = vperm.xlu0 %660, %v580
        %v662 = vpop.permute.xlu0 %661
        %665 = vset.pattern.permute.xlu0 1
        %666 = vperm.xlu0 %665, %v583
        %v667 = vpop.permute.xlu0 %666
        %670 = vset.pattern.permute.xlu0 1
        %671 = vperm.xlu0 %670, %v585
        %v672 = vpop.permute.xlu0 %671
        %675 = vset.pattern.permute.xlu0 1
        %676 = vperm.xlu0 %675, %v588
        %v677 = vpop.permute.xlu0 %676
        %680 = vset.pattern.permute.xlu0 1
        %681 = vperm.xlu0 %680, %v590
        %v682 = vpop.permute.xlu0 %681
        %685 = vset.pattern.permute.xlu0 1
        %686 = vperm.xlu0 %685, %v593
        %v687 = vpop.permute.xlu0 %686
        %690 = vset.pattern.permute.xlu0 1
        %691 = vperm.xlu0 %690, %v595
        %v692 = vpop.permute.xlu0 %691
        %695 = vset.pattern.permute.xlu0 1
        %696 = vperm.xlu0 %695, %v598
        %v697 = vpop.permute.xlu0 %696
        %700 = vset.pattern.permute.xlu0 1
        %701 = vperm.xlu0 %700, %v600
        %v702 = vpop.permute.xlu0 %701
        %705 = vset.pattern.permute.xlu0 1
        %706 = vperm.xlu0 %705, %v603
        %v707 = vpop.permute.xlu0 %706
        %710 = vset.pattern.permute.xlu0 1
        %711 = vperm.xlu0 %710, %v605
        %v712 = vpop.permute.xlu0 %711
        %715 = vset.pattern.permute.xlu0 1
        %716 = vperm.xlu0 %715, %v608
        %v717 = vpop.permute.xlu0 %716
        %720 = vset.pattern.permute.xlu0 1
        %721 = vperm.xlu0 %720, %v610
        %v722 = vpop.permute.xlu0 %721
        %v724 = vperm.slane %v628, 0
        %v725 = vadd.f32 %v647, %v724
        %v726 = vadd.f32 %v652, %v724
        %v727 = vadd.f32 %v657, %v724
        %v728 = vadd.f32 %v662, %v724
        %v729 = vadd.f32 %v667, %v724
        %v730 = vadd.f32 %v672, %v724
        %v731 = vadd.f32 %v677, %v724
        %v732 = vadd.f32 %v682, %v724
        %v733 = vadd.f32 %v687, %v724
        %v734 = vadd.f32 %v692, %v724
        %v735 = vadd.f32 %v697, %v724
        %v736 = vadd.f32 %v702, %v724
        %v737 = vadd.f32 %v707, %v724
        %v738 = vadd.f32 %v712, %v724
        %v739 = vadd.f32 %v717, %v724
        %v740 = vadd.f32 %v722, %v724
        %v741 = vmul.f32 %v725, 0.2
        %v742 = vmul.f32 %v726, 0.2
        %v743 = vmul.f32 %v727, 0.2
        %v744 = vmul.f32 %v728, 0.2
        %v745 = vmul.f32 %v729, 0.2
        %v746 = vmul.f32 %v730, 0.2
        %v747 = vmul.f32 %v731, 0.2
        %v748 = vmul.f32 %v732, 0.2
        %v749 = vmul.f32 %v733, 0.2
        %v750 = vmul.f32 %v734, 0.2
        %v751 = vmul.f32 %v735, 0.2
        %v752 = vmul.f32 %v736, 0.2
        %v753 = vmul.f32 %v737, 0.2
        %v754 = vmul.f32 %v738, 0.2
        %v755 = vmul.f32 %v739, 0.2
        %v756 = vmul.f32 %v740, 0.2
        %v757 = vmax.f32 %v725, %v741
        %v758 = vmax.f32 %v726, %v742
        %v759 = vmax.f32 %v727, %v743
        %v760 = vmax.f32 %v728, %v744
        %v761 = vmax.f32 %v729, %v745
        %v762 = vmax.f32 %v730, %v746
        %v763 = vmax.f32 %v731, %v747
        %v764 = vmax.f32 %v732, %v748
        %v765 = vmax.f32 %v733, %v749
        %v766 = vmax.f32 %v734, %v750
        %v767 = vmax.f32 %v735, %v751
        %v768 = vmax.f32 %v736, %v752
        %v769 = vmax.f32 %v737, %v753
        %v770 = vmax.f32 %v738, %v754
        %v771 = vmax.f32 %v739, %v755
        %v772 = vmax.f32 %v740, %v756
        %v773 = vadd.f32 %v757, %v354
        %v774 = vadd.f32 %v758, %v355
        %v775 = vadd.f32 %v759, %v356
        %v776 = vadd.f32 %v760, %v357
        %v777 = vadd.f32 %v761, %v358
        %v778 = vadd.f32 %v762, %v359
        %v779 = vadd.f32 %v763, %v360
        %v780 = vadd.f32 %v764, %v361
        %v781 = vadd.f32 %v765, %v362
        %v782 = vadd.f32 %v766, %v363
        %v783 = vadd.f32 %v767, %v364
        %v784 = vadd.f32 %v768, %v365
        %v785 = vadd.f32 %v769, %v366
        %v786 = vadd.f32 %v770, %v367
        %v787 = vadd.f32 %v771, %v368
        %v788 = vadd.f32 %v772, %v369
        %789 = vmax.xlane.f32.xlu0 %v773
        %v790 = vpop.xlane.xlu0 %789
        %791 = vmax.xlane.f32.xlu0 %v774
        %v792 = vpop.xlane.xlu0 %791
        %793 = vmax.xlane.f32.xlu0 %v775
        %v794 = vpop.xlane.xlu0 %793
        %795 = vmax.xlane.f32.xlu0 %v776
        %v796 = vpop.xlane.xlu0 %795
        %797 = vmax.xlane.f32.xlu0 %v777
        %v798 = vpop.xlane.xlu0 %797
        %799 = vmax.xlane.f32.xlu0 %v778
        %v800 = vpop.xlane.xlu0 %799
        %801 = vmax.xlane.f32.xlu0 %v779
        %v802 = vpop.xlane.xlu0 %801
        %803 = vmax.xlane.f32.xlu0 %v780
        %v804 = vpop.xlane.xlu0 %803
        %805 = vmax.xlane.f32.xlu0 %v781
        %v806 = vpop.xlane.xlu0 %805
        %807 = vmax.xlane.f32.xlu0 %v782
        %v808 = vpop.xlane.xlu0 %807
        %809 = vmax.xlane.f32.xlu0 %v783
        %v810 = vpop.xlane.xlu0 %809
        %811 = vmax.xlane.f32.xlu0 %v784
        %v812 = vpop.xlane.xlu0 %811
        %813 = vmax.xlane.f32.xlu0 %v785
        %v814 = vpop.xlane.xlu0 %813
        %815 = vmax.xlane.f32.xlu0 %v786
        %v816 = vpop.xlane.xlu0 %815
        %817 = vmax.xlane.f32.xlu0 %v787
        %v818 = vpop.xlane.xlu0 %817
        %819 = vmax.xlane.f32.xlu0 %v788
        %v820 = vpop.xlane.xlu0 %819
        %v821 = vsub.f32 %v773, %v790
        %v822 = vsub.f32 %v774, %v792
        %v823 = vsub.f32 %v775, %v794
        %v824 = vsub.f32 %v776, %v796
        %v825 = vsub.f32 %v777, %v798
        %v826 = vsub.f32 %v778, %v800
        %v827 = vsub.f32 %v779, %v802
        %v828 = vsub.f32 %v780, %v804
        %v829 = vsub.f32 %v781, %v806
        %v830 = vsub.f32 %v782, %v808
        %v831 = vsub.f32 %v783, %v810
        %v832 = vsub.f32 %v784, %v812
        %v833 = vsub.f32 %v785, %v814
        %v834 = vsub.f32 %v786, %v816
        %v835 = vsub.f32 %v787, %v818
        %v836 = vsub.f32 %v788, %v820
        %v837 = vmul.f32 %v821, 1.442695
        %v838 = vpow.pop %v837
        %v839 = vmul.f32 %v822, 1.442695
        %v840 = vpow.pop %v839
        %v841 = vmul.f32 %v823, 1.442695
        %v842 = vpow.pop %v841
        %v843 = vmul.f32 %v824, 1.442695
        %v844 = vpow.pop %v843
        %v845 = vmul.f32 %v825, 1.442695
        %v846 = vpow.pop %v845
        %v847 = vmul.f32 %v826, 1.442695
        %v848 = vpow.pop %v847
        %v849 = vmul.f32 %v827, 1.442695
        %v850 = vpow.pop %v849
        %v851 = vmul.f32 %v828, 1.442695
        %v852 = vpow.pop %v851
        %v853 = vmul.f32 %v829, 1.442695
        %v854 = vpow.pop %v853
        %v855 = vmul.f32 %v830, 1.442695
        %v856 = vpow.pop %v855
        %v857 = vmul.f32 %v831, 1.442695
        %v858 = vpow.pop %v857
        %v859 = vmul.f32 %v832, 1.442695
        %v860 = vpow.pop %v859
        %v861 = vmul.f32 %v833, 1.442695
        %v862 = vpow.pop %v861
        %v863 = vmul.f32 %v834, 1.442695
        %v864 = vpow.pop %v863
        %v865 = vmul.f32 %v835, 1.442695
        %v866 = vpow.pop %v865
        %v867 = vmul.f32 %v836, 1.442695
        %v868 = vpow.pop %v867
        %869 = vadd.xlane.f32.xlu0 %v838
        %v870 = vpop.xlane.xlu0 %869
        %871 = vadd.xlane.f32.xlu0 %v840
        %v872 = vpop.xlane.xlu0 %871
        %873 = vadd.xlane.f32.xlu0 %v842
        %v874 = vpop.xlane.xlu0 %873
        %875 = vadd.xlane.f32.xlu0 %v844
        %v876 = vpop.xlane.xlu0 %875
        %877 = vadd.xlane.f32.xlu0 %v846
        %v878 = vpop.xlane.xlu0 %877
        %879 = vadd.xlane.f32.xlu0 %v848
        %v880 = vpop.xlane.xlu0 %879
        %881 = vadd.xlane.f32.xlu0 %v850
        %v882 = vpop.xlane.xlu0 %881
        %883 = vadd.xlane.f32.xlu0 %v852
        %v884 = vpop.xlane.xlu0 %883
        %885 = vadd.xlane.f32.xlu0 %v854
        %v886 = vpop.xlane.xlu0 %885
        %887 = vadd.xlane.f32.xlu0 %v856
        %v888 = vpop.xlane.xlu0 %887
        %889 = vadd.xlane.f32.xlu0 %v858
        %v890 = vpop.xlane.xlu0 %889
        %891 = vadd.xlane.f32.xlu0 %v860
        %v892 = vpop.xlane.xlu0 %891
        %893 = vadd.xlane.f32.xlu0 %v862
        %v894 = vpop.xlane.xlu0 %893
        %895 = vadd.xlane.f32.xlu0 %v864
        %v896 = vpop.xlane.xlu0 %895
        %897 = vadd.xlane.f32.xlu0 %v866
        %v898 = vpop.xlane.xlu0 %897
        %899 = vadd.xlane.f32.xlu0 %v868
        %v900 = vpop.xlane.xlu0 %899
        %v901 = vrcp.pop %v870
        %v902 = vrcp.pop %v872
        %v903 = vrcp.pop %v874
        %v904 = vrcp.pop %v876
        %v905 = vrcp.pop %v878
        %v906 = vrcp.pop %v880
        %v907 = vrcp.pop %v882
        %v908 = vrcp.pop %v884
        %v909 = vrcp.pop %v886
        %v910 = vrcp.pop %v888
        %v911 = vrcp.pop %v890
        %v912 = vrcp.pop %v892
        %v913 = vrcp.pop %v894
        %v914 = vrcp.pop %v896
        %v915 = vrcp.pop %v898
        %v916 = vrcp.pop %v900
        %v917 = vmul.f32 %v838, %v901
        %v918 = vmul.f32 %v840, %v902
        %v919 = vmul.f32 %v842, %v903
        %v920 = vmul.f32 %v844, %v904
        %v921 = vmul.f32 %v846, %v905
        %v922 = vmul.f32 %v848, %v906
        %v923 = vmul.f32 %v850, %v907
        %v924 = vmul.f32 %v852, %v908
        %v925 = vmul.f32 %v854, %v909
        %v926 = vmul.f32 %v856, %v910
        %v927 = vmul.f32 %v858, %v911
        %v928 = vmul.f32 %v860, %v912
        %v929 = vmul.f32 %v862, %v913
        %v930 = vmul.f32 %v864, %v914
        %v931 = vmul.f32 %v866, %v915
        %v932 = vmul.f32 %v868, %v916
        %v933 = vpack.c.bf16 %v918, %v917
        %v934 = vpack.c.bf16 %v920, %v919
        %v935 = vpack.c.bf16 %v922, %v921
        %v936 = vpack.c.bf16 %v924, %v923
        %v937 = vpack.c.bf16 %v926, %v925
        %v938 = vpack.c.bf16 %v928, %v927
        %v939 = vpack.c.bf16 %v930, %v929
        %v940 = vpack.c.bf16 %v932, %v931
        %v941 = vld [vmem:[%s4] sm:$0x1]
        %v943 = vperm.slane %v941, 0
        %945 = vmatpush.bf16.msra.mxu0 %v498
        %946 = vmatpush.bf16.msra.mxu0 %v497
        %947 = vmatpush.bf16.msra.mxu0 %v496
        %948 = vmatpush.bf16.msra.mxu0 %v495
        %949 = vmatpush.bf16.msra.mxu0 %v494
        %950 = vmatpush.bf16.msra.mxu0 %v493
        %951 = vmatpush.bf16.msra.mxu0 %v492
        %952 = vmatpush.bf16.msra.mxu0 %v491
        %953 = vmatmul.bf16.gmra.mxu0 %v933
        %v954 = vpop.f32.mrf.mxu0
        %v955 = vadd.f32 %v943, %v954
        %v956 = vpop.f32.mrf.mxu0
        %v957 = vadd.f32 %v943, %v956
        %958 = vmatmul.bf16.gmra.mxu0 %v934
        %v959 = vpop.f32.mrf.mxu0
        %v960 = vadd.f32 %v943, %v959
        %v961 = vpop.f32.mrf.mxu0
        %v962 = vadd.f32 %v943, %v961
        %963 = vmatmul.bf16.gmra.mxu0 %v935
        %v964 = vpop.f32.mrf.mxu0
        %v965 = vadd.f32 %v943, %v964
        %v966 = vpop.f32.mrf.mxu0
        %v967 = vadd.f32 %v943, %v966
        %968 = vmatmul.bf16.gmra.mxu0 %v936
        %v969 = vpop.f32.mrf.mxu0
        %v970 = vadd.f32 %v943, %v969
        %v971 = vpop.f32.mrf.mxu0
        %v972 = vadd.f32 %v943, %v971
        %973 = vmatmul.bf16.gmra.mxu0 %v937
        %v974 = vpop.f32.mrf.mxu0
        %v975 = vadd.f32 %v943, %v974
        %v976 = vpop.f32.mrf.mxu0
        %v977 = vadd.f32 %v943, %v976
        %978 = vmatmul.bf16.gmra.mxu0 %v938
        %v979 = vpop.f32.mrf.mxu0
        %v980 = vadd.f32 %v943, %v979
        %v981 = vpop.f32.mrf.mxu0
        %v982 = vadd.f32 %v943, %v981
        %983 = vmatmul.bf16.gmra.mxu0 %v939
        %v984 = vpop.f32.mrf.mxu0
        %v985 = vadd.f32 %v943, %v984
        %v986 = vpop.f32.mrf.mxu0
        %v987 = vadd.f32 %v943, %v986
        %988 = vmatmul.bf16.gmra.mxu0 %v940
        %v989 = vpop.f32.mrf.mxu0
        %v990 = vadd.f32 %v943, %v989
        %v991 = vpop.f32.mrf.mxu0
        %v992 = vadd.f32 %v943, %v991
        %993 = vdwg.mxu0
        %v994 = vmax.f32 %v955, 0.0
        %v995 = vmax.f32 %v957, 0.0
        %v996 = vmax.f32 %v960, 0.0
        %v997 = vmax.f32 %v962, 0.0
        %v998 = vmax.f32 %v965, 0.0
        %v999 = vmax.f32 %v967, 0.0
        %v1000 = vmax.f32 %v970, 0.0
        %v1001 = vmax.f32 %v972, 0.0
        %v1002 = vmax.f32 %v975, 0.0
        %v1003 = vmax.f32 %v977, 0.0
        %v1004 = vmax.f32 %v980, 0.0
        %v1005 = vmax.f32 %v982, 0.0
        %v1006 = vmax.f32 %v985, 0.0
        %v1007 = vmax.f32 %v987, 0.0
        %v1008 = vmax.f32 %v990, 0.0
        %v1009 = vmax.f32 %v992, 0.0
        %v1010 = vpack.c.bf16 %v995, %v994
        %v1011 = vpack.c.bf16 %v997, %v996
        %v1012 = vpack.c.bf16 %v999, %v998
        %v1013 = vpack.c.bf16 %v1001, %v1000
        %v1014 = vpack.c.bf16 %v1003, %v1002
        %v1015 = vpack.c.bf16 %v1005, %v1004
        %v1016 = vpack.c.bf16 %v1007, %v1006
        %v1017 = vpack.c.bf16 %v1009, %v1008
        %s1018 = scalar_lea.vmem [#allocation7], 64
        %v1019 = vld [vmem:[%s1018] sm:$0xf]
        %v1020 = vld [vmem:[%s1018 + $0x4] sm:$0xf]
        %v1021 = vld [vmem:[%s1018 + $0x8] sm:$0xf]
        %v1022 = vld [vmem:[%s1018 + $0xc] sm:$0xf]
        %v1023 = vld [vmem:[%s1018 + $0x10] sm:$0xf]
        %v1024 = vld [vmem:[%s1018 + $0x14] sm:$0xf]
        %v1025 = vld [vmem:[%s1018 + $0x18] sm:$0xf]
        %v1026 = vld [vmem:[%s1018 + $0x1c] sm:$0xf]
        %v1027 = vld [vmem:[%s1018 + $0x20] sm:$0xf]
        %v1028 = vld [vmem:[%s1018 + $0x24] sm:$0xf]
        %v1029 = vld [vmem:[%s1018 + $0x28] sm:$0xf]
        %v1030 = vld [vmem:[%s1018 + $0x2c] sm:$0xf]
        %v1031 = vld [vmem:[%s1018 + $0x30] sm:$0xf]
        %v1032 = vld [vmem:[%s1018 + $0x34] sm:$0xf]
        %v1033 = vld [vmem:[%s1018 + $0x38] sm:$0xf]
        %v1034 = vld [vmem:[%s1018 + $0x3c] sm:$0xf]
        %v1051 = vunpack.c.l.b16 %v1019
        %v1052 = vunpack.c.l.b16 %v1020
        %v1053 = vunpack.c.l.b16 %v1021
        %v1054 = vunpack.c.l.b16 %v1022
        %v1055 = vunpack.c.l.b16 %v1023
        %v1056 = vunpack.c.l.b16 %v1024
        %v1057 = vunpack.c.l.b16 %v1025
        %v1058 = vunpack.c.l.b16 %v1026
        %v1059 = vunpack.c.l.b16 %v1027
        %v1060 = vunpack.c.l.b16 %v1028
        %v1061 = vunpack.c.l.b16 %v1029
        %v1062 = vunpack.c.l.b16 %v1030
        %v1063 = vunpack.c.l.b16 %v1031
        %v1064 = vunpack.c.l.b16 %v1032
        %v1065 = vunpack.c.l.b16 %v1033
        %v1066 = vunpack.c.l.b16 %v1034
        %v1067 = vpack.c.b16 %v1052, %v1051
        %v1068 = vpack.c.b16 %v1054, %v1053
        %v1069 = vpack.c.b16 %v1056, %v1055
        %v1070 = vpack.c.b16 %v1058, %v1057
        %v1071 = vpack.c.b16 %v1060, %v1059
        %v1072 = vpack.c.b16 %v1062, %v1061
        %v1073 = vpack.c.b16 %v1064, %v1063
        %v1074 = vpack.c.b16 %v1066, %v1065
        %1083 = vmatpush.bf16.msra.mxu0 %v1074
        %1084 = vmatpush.bf16.msra.mxu0 %v1073
        %1085 = vmatpush.bf16.msra.mxu0 %v1072
        %1086 = vmatpush.bf16.msra.mxu0 %v1071
        %1087 = vmatpush.bf16.msra.mxu0 %v1070
        %1088 = vmatpush.bf16.msra.mxu0 %v1069
        %1089 = vmatpush.bf16.msra.mxu0 %v1068
        %1090 = vmatpush.bf16.msra.mxu0 %v1067
        %1091 = vmatmul.bf16.gmra.mxu0 %v1010
        %v1092 = vpop.f32.mrf.mxu0
        %v1093 = vadd.f32 0.0, %v1092
        %v1094 = vpop.f32.mrf.mxu0
        %v1095 = vadd.f32 0.0, %v1094
        %1096 = vmatmul.bf16.gmra.mxu0 %v1011
        %v1097 = vpop.f32.mrf.mxu0
        %v1098 = vadd.f32 0.0, %v1097
        %v1099 = vpop.f32.mrf.mxu0
        %v1100 = vadd.f32 0.0, %v1099
        %1101 = vmatmul.bf16.gmra.mxu0 %v1012
        %v1102 = vpop.f32.mrf.mxu0
        %v1103 = vadd.f32 0.0, %v1102
        %v1104 = vpop.f32.mrf.mxu0
        %v1105 = vadd.f32 0.0, %v1104
        %1106 = vmatmul.bf16.gmra.mxu0 %v1013
        %v1107 = vpop.f32.mrf.mxu0
        %v1108 = vadd.f32 0.0, %v1107
        %v1109 = vpop.f32.mrf.mxu0
        %v1110 = vadd.f32 0.0, %v1109
        %1111 = vmatmul.bf16.gmra.mxu0 %v1014
        %v1112 = vpop.f32.mrf.mxu0
        %v1113 = vadd.f32 0.0, %v1112
        %v1114 = vpop.f32.mrf.mxu0
        %v1115 = vadd.f32 0.0, %v1114
        %1116 = vmatmul.bf16.gmra.mxu0 %v1015
        %v1117 = vpop.f32.mrf.mxu0
        %v1118 = vadd.f32 0.0, %v1117
        %v1119 = vpop.f32.mrf.mxu0
        %v1120 = vadd.f32 0.0, %v1119
        %1121 = vmatmul.bf16.gmra.mxu0 %v1016
        %v1122 = vpop.f32.mrf.mxu0
        %v1123 = vadd.f32 0.0, %v1122
        %v1124 = vpop.f32.mrf.mxu0
        %v1125 = vadd.f32 0.0, %v1124
        %1126 = vmatmul.bf16.gmra.mxu0 %v1017
        %v1127 = vpop.f32.mrf.mxu0
        %v1128 = vadd.f32 0.0, %v1127
        %v1129 = vpop.f32.mrf.mxu0
        %v1130 = vadd.f32 0.0, %v1129
        %1131 = vdwg.mxu0
        %v1132 = vpack.c.bf16 %v1095, %v1093
        %v1133 = vpack.c.bf16 %v1100, %v1098
        %v1134 = vpack.c.bf16 %v1105, %v1103
        %v1135 = vpack.c.bf16 %v1110, %v1108
        %v1136 = vpack.c.bf16 %v1115, %v1113
        %v1137 = vpack.c.bf16 %v1120, %v1118
        %v1138 = vpack.c.bf16 %v1125, %v1123
        %v1139 = vpack.c.bf16 %v1130, %v1128
        %s1140 = scalar_lea.vmem [#allocation8], 64
        %v1141 = vld [vmem:[%s1140] sm:$0xf]
        %v1142 = vld [vmem:[%s1140 + $0x4] sm:$0xf]
        %v1143 = vld [vmem:[%s1140 + $0x8] sm:$0xf]
        %v1144 = vld [vmem:[%s1140 + $0xc] sm:$0xf]
        %v1145 = vld [vmem:[%s1140 + $0x10] sm:$0xf]
        %v1146 = vld [vmem:[%s1140 + $0x14] sm:$0xf]
        %v1147 = vld [vmem:[%s1140 + $0x18] sm:$0xf]
        %v1148 = vld [vmem:[%s1140 + $0x1c] sm:$0xf]
        %v1149 = vld [vmem:[%s1140 + $0x20] sm:$0xf]
        %v1150 = vld [vmem:[%s1140 + $0x24] sm:$0xf]
        %v1151 = vld [vmem:[%s1140 + $0x28] sm:$0xf]
        %v1152 = vld [vmem:[%s1140 + $0x2c] sm:$0xf]
        %v1153 = vld [vmem:[%s1140 + $0x30] sm:$0xf]
        %v1154 = vld [vmem:[%s1140 + $0x34] sm:$0xf]
        %v1155 = vld [vmem:[%s1140 + $0x38] sm:$0xf]
        %v1156 = vld [vmem:[%s1140 + $0x3c] sm:$0xf]
        %v1173 = vunpack.c.l.b16 %v1141
        %v1174 = vunpack.c.l.b16 %v1142
        %v1175 = vunpack.c.l.b16 %v1143
        %v1176 = vunpack.c.l.b16 %v1144
        %v1177 = vunpack.c.l.b16 %v1145
        %v1178 = vunpack.c.l.b16 %v1146
        %v1179 = vunpack.c.l.b16 %v1147
        %v1180 = vunpack.c.l.b16 %v1148
        %v1181 = vunpack.c.l.b16 %v1149
        %v1182 = vunpack.c.l.b16 %v1150
        %v1183 = vunpack.c.l.b16 %v1151
        %v1184 = vunpack.c.l.b16 %v1152
        %v1185 = vunpack.c.l.b16 %v1153
        %v1186 = vunpack.c.l.b16 %v1154
        %v1187 = vunpack.c.l.b16 %v1155
        %v1188 = vunpack.c.l.b16 %v1156
        %v1189 = vpack.c.b16 %v1174, %v1173
        %v1190 = vpack.c.b16 %v1176, %v1175
        %v1191 = vpack.c.b16 %v1178, %v1177
        %v1192 = vpack.c.b16 %v1180, %v1179
        %v1193 = vpack.c.b16 %v1182, %v1181
        %v1194 = vpack.c.b16 %v1184, %v1183
        %v1195 = vpack.c.b16 %v1186, %v1185
        %v1196 = vpack.c.b16 %v1188, %v1187
        %1205 = vmatpush.bf16.msra.mxu0 %v1196
        %1206 = vmatpush.bf16.msra.mxu0 %v1195
        %1207 = vmatpush.bf16.msra.mxu0 %v1194
        %1208 = vmatpush.bf16.msra.mxu0 %v1193
        %1209 = vmatpush.bf16.msra.mxu0 %v1192
        %1210 = vmatpush.bf16.msra.mxu0 %v1191
        %1211 = vmatpush.bf16.msra.mxu0 %v1190
        %1212 = vmatpush.bf16.msra.mxu0 %v1189
        %1213 = vmatmul.bf16.gmra.mxu0 %v1132
        %v1214 = vpop.f32.mrf.mxu0
        %v1215 = vadd.f32 0.0, %v1214
        %v1216 = vpop.f32.mrf.mxu0
        %v1217 = vadd.f32 0.0, %v1216
        %1218 = vmatmul.bf16.gmra.mxu0 %v1133
        %v1219 = vpop.f32.mrf.mxu0
        %v1220 = vadd.f32 0.0, %v1219
        %v1221 = vpop.f32.mrf.mxu0
        %v1222 = vadd.f32 0.0, %v1221
        %1223 = vmatmul.bf16.gmra.mxu0 %v1134
        %v1224 = vpop.f32.mrf.mxu0
        %v1225 = vadd.f32 0.0, %v1224
        %v1226 = vpop.f32.mrf.mxu0
        %v1227 = vadd.f32 0.0, %v1226
        %1228 = vmatmul.bf16.gmra.mxu0 %v1135
        %v1229 = vpop.f32.mrf.mxu0
        %v1230 = vadd.f32 0.0, %v1229
        %v1231 = vpop.f32.mrf.mxu0
        %v1232 = vadd.f32 0.0, %v1231
        %1233 = vmatmul.bf16.gmra.mxu0 %v1136
        %v1234 = vpop.f32.mrf.mxu0
        %v1235 = vadd.f32 0.0, %v1234
        %v1236 = vpop.f32.mrf.mxu0
        %v1237 = vadd.f32 0.0, %v1236
        %1238 = vmatmul.bf16.gmra.mxu0 %v1137
        %v1239 = vpop.f32.mrf.mxu0
        %v1240 = vadd.f32 0.0, %v1239
        %v1241 = vpop.f32.mrf.mxu0
        %v1242 = vadd.f32 0.0, %v1241
        %1243 = vmatmul.bf16.gmra.mxu0 %v1138
        %v1244 = vpop.f32.mrf.mxu0
        %v1245 = vadd.f32 0.0, %v1244
        %v1246 = vpop.f32.mrf.mxu0
        %v1247 = vadd.f32 0.0, %v1246
        %1248 = vmatmul.bf16.gmra.mxu0 %v1139
        %v1249 = vpop.f32.mrf.mxu0
        %v1250 = vadd.f32 0.0, %v1249
        %v1251 = vpop.f32.mrf.mxu0
        %v1252 = vadd.f32 0.0, %v1251
        %1253 = vdwg.mxu0
        %1254 = vxpose.xlu0.b32.start [1/16] %v1215, 128
        %1255 = vxpose.xlu0.b32.cont [2/16] %v1217, 128
        %1256 = vxpose.xlu0.b32.cont [3/16] %v1220, 128
        %1257 = vxpose.xlu0.b32.cont [4/16] %v1222, 128
        %1258 = vxpose.xlu0.b32.cont [5/16] %v1225, 128
        %1259 = vxpose.xlu0.b32.cont [6/16] %v1227, 128
        %1260 = vxpose.xlu0.b32.cont [7/16] %v1230, 128
        %1261 = vxpose.xlu0.b32.cont [8/16] %v1232, 128
        %1262 = vxpose.xlu0.b32.cont [9/16] %v1235, 128
        %1263 = vxpose.xlu0.b32.cont [10/16] %v1237, 128
        %1264 = vxpose.xlu0.b32.cont [11/16] %v1240, 128
        %1265 = vxpose.xlu0.b32.cont [12/16] %v1242, 128
        %1266 = vxpose.xlu0.b32.cont [13/16] %v1245, 128
        %1267 = vxpose.xlu0.b32.cont [14/16] %v1247, 128
        %1268 = vxpose.xlu0.b32.cont [15/16] %v1250, 128
        %1269 = vxpose.xlu0.b32.end [16/16] %v1252, 128
        %v1270 = vpop.trf.xlu0
        %v1271 = vpop.trf.xlu0
        %v1272 = vpop.trf.xlu0
        %v1273 = vpop.trf.xlu0
        %v1274 = vpop.trf.xlu0
        %v1275 = vpop.trf.xlu0
        %v1276 = vpop.trf.xlu0
        %v1277 = vpop.trf.xlu0
        %v1278 = vpop.trf.xlu0
        %v1279 = vpop.trf.xlu0
        %v1280 = vpop.trf.xlu0
        %v1281 = vpop.trf.xlu0
        %v1282 = vpop.trf.xlu0
        %v1283 = vpop.trf.xlu0
        %v1284 = vpop.trf.xlu0
        %v1285 = vpop.trf.xlu0
        %1287 = vset.pattern.permute.xlu0 1
        %1288 = vperm.xlu0 %1287, %v1215
        %v1289 = vpop.permute.xlu0 %1288
        %1292 = vset.pattern.permute.xlu0 1
        %1293 = vperm.xlu0 %1292, %v1217
        %v1294 = vpop.permute.xlu0 %1293
        %1297 = vset.pattern.permute.xlu0 1
        %1298 = vperm.xlu0 %1297, %v1220
        %v1299 = vpop.permute.xlu0 %1298
        %1302 = vset.pattern.permute.xlu0 1
        %1303 = vperm.xlu0 %1302, %v1222
        %v1304 = vpop.permute.xlu0 %1303
        %1307 = vset.pattern.permute.xlu0 1
        %1308 = vperm.xlu0 %1307, %v1225
        %v1309 = vpop.permute.xlu0 %1308
        %1312 = vset.pattern.permute.xlu0 1
        %1313 = vperm.xlu0 %1312, %v1227
        %v1314 = vpop.permute.xlu0 %1313
        %1317 = vset.pattern.permute.xlu0 1
        %1318 = vperm.xlu0 %1317, %v1230
        %v1319 = vpop.permute.xlu0 %1318
        %1322 = vset.pattern.permute.xlu0 1
        %1323 = vperm.xlu0 %1322, %v1232
        %v1324 = vpop.permute.xlu0 %1323
        %1327 = vset.pattern.permute.xlu0 1
        %1328 = vperm.xlu0 %1327, %v1235
        %v1329 = vpop.permute.xlu0 %1328
        %1332 = vset.pattern.permute.xlu0 1
        %1333 = vperm.xlu0 %1332, %v1237
        %v1334 = vpop.permute.xlu0 %1333
        %1337 = vset.pattern.permute.xlu0 1
        %1338 = vperm.xlu0 %1337, %v1240
        %v1339 = vpop.permute.xlu0 %1338
        %1342 = vset.pattern.permute.xlu0 1
        %1343 = vperm.xlu0 %1342, %v1242
        %v1344 = vpop.permute.xlu0 %1343
        %1347 = vset.pattern.permute.xlu0 1
        %1348 = vperm.xlu0 %1347, %v1245
        %v1349 = vpop.permute.xlu0 %1348
        %1352 = vset.pattern.permute.xlu0 1
        %1353 = vperm.xlu0 %1352, %v1247
        %v1354 = vpop.permute.xlu0 %1353
        %1357 = vset.pattern.permute.xlu0 1
        %1358 = vperm.xlu0 %1357, %v1250
        %v1359 = vpop.permute.xlu0 %1358
        %1362 = vset.pattern.permute.xlu0 1
        %1363 = vperm.xlu0 %1362, %v1252
        %v1364 = vpop.permute.xlu0 %1363
        %v1366 = vperm.slane %v1270, 0
        %v1367 = vadd.f32 %v1289, %v1366
        %v1368 = vadd.f32 %v1294, %v1366
        %v1369 = vadd.f32 %v1299, %v1366
        %v1370 = vadd.f32 %v1304, %v1366
        %v1371 = vadd.f32 %v1309, %v1366
        %v1372 = vadd.f32 %v1314, %v1366
        %v1373 = vadd.f32 %v1319, %v1366
        %v1374 = vadd.f32 %v1324, %v1366
        %v1375 = vadd.f32 %v1329, %v1366
        %v1376 = vadd.f32 %v1334, %v1366
        %v1377 = vadd.f32 %v1339, %v1366
        %v1378 = vadd.f32 %v1344, %v1366
        %v1379 = vadd.f32 %v1349, %v1366
        %v1380 = vadd.f32 %v1354, %v1366
        %v1381 = vadd.f32 %v1359, %v1366
        %v1382 = vadd.f32 %v1364, %v1366
        %v1383 = vmul.f32 %v1367, 0.2
        %v1384 = vmul.f32 %v1368, 0.2
        %v1385 = vmul.f32 %v1369, 0.2
        %v1386 = vmul.f32 %v1370, 0.2
        %v1387 = vmul.f32 %v1371, 0.2
        %v1388 = vmul.f32 %v1372, 0.2
        %v1389 = vmul.f32 %v1373, 0.2
        %v1390 = vmul.f32 %v1374, 0.2
        %v1391 = vmul.f32 %v1375, 0.2
        %v1392 = vmul.f32 %v1376, 0.2
        %v1393 = vmul.f32 %v1377, 0.2
        %v1394 = vmul.f32 %v1378, 0.2
        %v1395 = vmul.f32 %v1379, 0.2
        %v1396 = vmul.f32 %v1380, 0.2
        %v1397 = vmul.f32 %v1381, 0.2
        %v1398 = vmul.f32 %v1382, 0.2
        %v1399 = vmax.f32 %v1367, %v1383
        %v1400 = vmax.f32 %v1368, %v1384
        %v1401 = vmax.f32 %v1369, %v1385
        %v1402 = vmax.f32 %v1370, %v1386
        %v1403 = vmax.f32 %v1371, %v1387
        %v1404 = vmax.f32 %v1372, %v1388
        %v1405 = vmax.f32 %v1373, %v1389
        %v1406 = vmax.f32 %v1374, %v1390
        %v1407 = vmax.f32 %v1375, %v1391
        %v1408 = vmax.f32 %v1376, %v1392
        %v1409 = vmax.f32 %v1377, %v1393
        %v1410 = vmax.f32 %v1378, %v1394
        %v1411 = vmax.f32 %v1379, %v1395
        %v1412 = vmax.f32 %v1380, %v1396
        %v1413 = vmax.f32 %v1381, %v1397
        %v1414 = vmax.f32 %v1382, %v1398
        %v1415 = vadd.f32 %v1399, %v354
        %v1416 = vadd.f32 %v1400, %v355
        %v1417 = vadd.f32 %v1401, %v356
        %v1418 = vadd.f32 %v1402, %v357
        %v1419 = vadd.f32 %v1403, %v358
        %v1420 = vadd.f32 %v1404, %v359
        %v1421 = vadd.f32 %v1405, %v360
        %v1422 = vadd.f32 %v1406, %v361
        %v1423 = vadd.f32 %v1407, %v362
        %v1424 = vadd.f32 %v1408, %v363
        %v1425 = vadd.f32 %v1409, %v364
        %v1426 = vadd.f32 %v1410, %v365
        %v1427 = vadd.f32 %v1411, %v366
        %v1428 = vadd.f32 %v1412, %v367
        %v1429 = vadd.f32 %v1413, %v368
        %v1430 = vadd.f32 %v1414, %v369
        %1431 = vmax.xlane.f32.xlu0 %v1415
        %v1432 = vpop.xlane.xlu0 %1431
        %1433 = vmax.xlane.f32.xlu0 %v1416
        %v1434 = vpop.xlane.xlu0 %1433
        %1435 = vmax.xlane.f32.xlu0 %v1417
        %v1436 = vpop.xlane.xlu0 %1435
        %1437 = vmax.xlane.f32.xlu0 %v1418
        %v1438 = vpop.xlane.xlu0 %1437
        %1439 = vmax.xlane.f32.xlu0 %v1419
        %v1440 = vpop.xlane.xlu0 %1439
        %1441 = vmax.xlane.f32.xlu0 %v1420
        %v1442 = vpop.xlane.xlu0 %1441
        %1443 = vmax.xlane.f32.xlu0 %v1421
        %v1444 = vpop.xlane.xlu0 %1443
        %1445 = vmax.xlane.f32.xlu0 %v1422
        %v1446 = vpop.xlane.xlu0 %1445
        %1447 = vmax.xlane.f32.xlu0 %v1423
        %v1448 = vpop.xlane.xlu0 %1447
        %1449 = vmax.xlane.f32.xlu0 %v1424
        %v1450 = vpop.xlane.xlu0 %1449
        %1451 = vmax.xlane.f32.xlu0 %v1425
        %v1452 = vpop.xlane.xlu0 %1451
        %1453 = vmax.xlane.f32.xlu0 %v1426
        %v1454 = vpop.xlane.xlu0 %1453
        %1455 = vmax.xlane.f32.xlu0 %v1427
        %v1456 = vpop.xlane.xlu0 %1455
        %1457 = vmax.xlane.f32.xlu0 %v1428
        %v1458 = vpop.xlane.xlu0 %1457
        %1459 = vmax.xlane.f32.xlu0 %v1429
        %v1460 = vpop.xlane.xlu0 %1459
        %1461 = vmax.xlane.f32.xlu0 %v1430
        %v1462 = vpop.xlane.xlu0 %1461
        %v1463 = vsub.f32 %v1415, %v1432
        %v1464 = vsub.f32 %v1416, %v1434
        %v1465 = vsub.f32 %v1417, %v1436
        %v1466 = vsub.f32 %v1418, %v1438
        %v1467 = vsub.f32 %v1419, %v1440
        %v1468 = vsub.f32 %v1420, %v1442
        %v1469 = vsub.f32 %v1421, %v1444
        %v1470 = vsub.f32 %v1422, %v1446
        %v1471 = vsub.f32 %v1423, %v1448
        %v1472 = vsub.f32 %v1424, %v1450
        %v1473 = vsub.f32 %v1425, %v1452
        %v1474 = vsub.f32 %v1426, %v1454
        %v1475 = vsub.f32 %v1427, %v1456
        %v1476 = vsub.f32 %v1428, %v1458
        %v1477 = vsub.f32 %v1429, %v1460
        %v1478 = vsub.f32 %v1430, %v1462
        %v1479 = vmul.f32 %v1463, 1.442695
        %v1480 = vpow.pop %v1479
        %v1481 = vmul.f32 %v1464, 1.442695
        %v1482 = vpow.pop %v1481
        %v1483 = vmul.f32 %v1465, 1.442695
        %v1484 = vpow.pop %v1483
        %v1485 = vmul.f32 %v1466, 1.442695
        %v1486 = vpow.pop %v1485
        %v1487 = vmul.f32 %v1467, 1.442695
        %v1488 = vpow.pop %v1487
        %v1489 = vmul.f32 %v1468, 1.442695
        %v1490 = vpow.pop %v1489
        %v1491 = vmul.f32 %v1469, 1.442695
        %v1492 = vpow.pop %v1491
        %v1493 = vmul.f32 %v1470, 1.442695
        %v1494 = vpow.pop %v1493
        %v1495 = vmul.f32 %v1471, 1.442695
        %v1496 = vpow.pop %v1495
        %v1497 = vmul.f32 %v1472, 1.442695
        %v1498 = vpow.pop %v1497
        %v1499 = vmul.f32 %v1473, 1.442695
        %v1500 = vpow.pop %v1499
        %v1501 = vmul.f32 %v1474, 1.442695
        %v1502 = vpow.pop %v1501
        %v1503 = vmul.f32 %v1475, 1.442695
        %v1504 = vpow.pop %v1503
        %v1505 = vmul.f32 %v1476, 1.442695
        %v1506 = vpow.pop %v1505
        %v1507 = vmul.f32 %v1477, 1.442695
        %v1508 = vpow.pop %v1507
        %v1509 = vmul.f32 %v1478, 1.442695
        %v1510 = vpow.pop %v1509
        %1511 = vadd.xlane.f32.xlu0 %v1480
        %v1512 = vpop.xlane.xlu0 %1511
        %1513 = vadd.xlane.f32.xlu0 %v1482
        %v1514 = vpop.xlane.xlu0 %1513
        %1515 = vadd.xlane.f32.xlu0 %v1484
        %v1516 = vpop.xlane.xlu0 %1515
        %1517 = vadd.xlane.f32.xlu0 %v1486
        %v1518 = vpop.xlane.xlu0 %1517
        %1519 = vadd.xlane.f32.xlu0 %v1488
        %v1520 = vpop.xlane.xlu0 %1519
        %1521 = vadd.xlane.f32.xlu0 %v1490
        %v1522 = vpop.xlane.xlu0 %1521
        %1523 = vadd.xlane.f32.xlu0 %v1492
        %v1524 = vpop.xlane.xlu0 %1523
        %1525 = vadd.xlane.f32.xlu0 %v1494
        %v1526 = vpop.xlane.xlu0 %1525
        %1527 = vadd.xlane.f32.xlu0 %v1496
        %v1528 = vpop.xlane.xlu0 %1527
        %1529 = vadd.xlane.f32.xlu0 %v1498
        %v1530 = vpop.xlane.xlu0 %1529
        %1531 = vadd.xlane.f32.xlu0 %v1500
        %v1532 = vpop.xlane.xlu0 %1531
        %1533 = vadd.xlane.f32.xlu0 %v1502
        %v1534 = vpop.xlane.xlu0 %1533
        %1535 = vadd.xlane.f32.xlu0 %v1504
        %v1536 = vpop.xlane.xlu0 %1535
        %1537 = vadd.xlane.f32.xlu0 %v1506
        %v1538 = vpop.xlane.xlu0 %1537
        %1539 = vadd.xlane.f32.xlu0 %v1508
        %v1540 = vpop.xlane.xlu0 %1539
        %1541 = vadd.xlane.f32.xlu0 %v1510
        %v1542 = vpop.xlane.xlu0 %1541
        %v1543 = vrcp.pop %v1512
        %v1544 = vrcp.pop %v1514
        %v1545 = vrcp.pop %v1516
        %v1546 = vrcp.pop %v1518
        %v1547 = vrcp.pop %v1520
        %v1548 = vrcp.pop %v1522
        %v1549 = vrcp.pop %v1524
        %v1550 = vrcp.pop %v1526
        %v1551 = vrcp.pop %v1528
        %v1552 = vrcp.pop %v1530
        %v1553 = vrcp.pop %v1532
        %v1554 = vrcp.pop %v1534
        %v1555 = vrcp.pop %v1536
        %v1556 = vrcp.pop %v1538
        %v1557 = vrcp.pop %v1540
        %v1558 = vrcp.pop %v1542
        %v1559 = vmul.f32 %v1480, %v1543
        %v1560 = vmul.f32 %v1482, %v1544
        %v1561 = vmul.f32 %v1484, %v1545
        %v1562 = vmul.f32 %v1486, %v1546
        %v1563 = vmul.f32 %v1488, %v1547
        %v1564 = vmul.f32 %v1490, %v1548
        %v1565 = vmul.f32 %v1492, %v1549
        %v1566 = vmul.f32 %v1494, %v1550
        %v1567 = vmul.f32 %v1496, %v1551
        %v1568 = vmul.f32 %v1498, %v1552
        %v1569 = vmul.f32 %v1500, %v1553
        %v1570 = vmul.f32 %v1502, %v1554
        %v1571 = vmul.f32 %v1504, %v1555
        %v1572 = vmul.f32 %v1506, %v1556
        %v1573 = vmul.f32 %v1508, %v1557
        %v1574 = vmul.f32 %v1510, %v1558
        %v1575 = vpack.c.bf16 %v1560, %v1559
        %v1576 = vpack.c.bf16 %v1562, %v1561
        %v1577 = vpack.c.bf16 %v1564, %v1563
        %v1578 = vpack.c.bf16 %v1566, %v1565
        %v1579 = vpack.c.bf16 %v1568, %v1567
        %v1580 = vpack.c.bf16 %v1570, %v1569
        %v1581 = vpack.c.bf16 %v1572, %v1571
        %v1582 = vpack.c.bf16 %v1574, %v1573
        %s1583 = scalar_lea.vmem %s4, 1
        %v1584 = vld [vmem:[%s1583] sm:$0x1]
        %v1586 = vperm.slane %v1584, 0
        %1588 = vmatpush.bf16.msra.mxu0 %v1139
        %1589 = vmatpush.bf16.msra.mxu0 %v1138
        %1590 = vmatpush.bf16.msra.mxu0 %v1137
        %1591 = vmatpush.bf16.msra.mxu0 %v1136
        %1592 = vmatpush.bf16.msra.mxu0 %v1135
        %1593 = vmatpush.bf16.msra.mxu0 %v1134
        %1594 = vmatpush.bf16.msra.mxu0 %v1133
        %1595 = vmatpush.bf16.msra.mxu0 %v1132
        %1596 = vmatmul.bf16.gmra.mxu0 %v1575
        %v1597 = vpop.f32.mrf.mxu0
        %v1598 = vadd.f32 %v1586, %v1597
        %v1599 = vpop.f32.mrf.mxu0
        %v1600 = vadd.f32 %v1586, %v1599
        %1601 = vmatmul.bf16.gmra.mxu0 %v1576
        %v1602 = vpop.f32.mrf.mxu0
        %v1603 = vadd.f32 %v1586, %v1602
        %v1604 = vpop.f32.mrf.mxu0
        %v1605 = vadd.f32 %v1586, %v1604
        %1606 = vmatmul.bf16.gmra.mxu0 %v1577
        %v1607 = vpop.f32.mrf.mxu0
        %v1608 = vadd.f32 %v1586, %v1607
        %v1609 = vpop.f32.mrf.mxu0
        %v1610 = vadd.f32 %v1586, %v1609
        %1611 = vmatmul.bf16.gmra.mxu0 %v1578
        %v1612 = vpop.f32.mrf.mxu0
        %v1613 = vadd.f32 %v1586, %v1612
        %v1614 = vpop.f32.mrf.mxu0
        %v1615 = vadd.f32 %v1586, %v1614
        %1616 = vmatmul.bf16.gmra.mxu0 %v1579
        %v1617 = vpop.f32.mrf.mxu0
        %v1618 = vadd.f32 %v1586, %v1617
        %v1619 = vpop.f32.mrf.mxu0
        %v1620 = vadd.f32 %v1586, %v1619
        %1621 = vmatmul.bf16.gmra.mxu0 %v1580
        %v1622 = vpop.f32.mrf.mxu0
        %v1623 = vadd.f32 %v1586, %v1622
        %v1624 = vpop.f32.mrf.mxu0
        %v1625 = vadd.f32 %v1586, %v1624
        %1626 = vmatmul.bf16.gmra.mxu0 %v1581
        %v1627 = vpop.f32.mrf.mxu0
        %v1628 = vadd.f32 %v1586, %v1627
        %v1629 = vpop.f32.mrf.mxu0
        %v1630 = vadd.f32 %v1586, %v1629
        %1631 = vmatmul.bf16.gmra.mxu0 %v1582
        %v1632 = vpop.f32.mrf.mxu0
        %v1633 = vadd.f32 %v1586, %v1632
        %v1634 = vpop.f32.mrf.mxu0
        %v1635 = vadd.f32 %v1586, %v1634
        %1636 = vdwg.mxu0
        %1637 = vst [vmem:[%s319] sm:$0xff] %v1598
        %1638 = vst [vmem:[%s319 + $0x8] sm:$0xff] %v1600
        %1639 = vst [vmem:[%s319 + $0x10] sm:$0xff] %v1603
        %1640 = vst [vmem:[%s319 + $0x18] sm:$0xff] %v1605
        %1641 = vst [vmem:[%s319 + $0x20] sm:$0xff] %v1608
        %1642 = vst [vmem:[%s319 + $0x28] sm:$0xff] %v1610
        %1643 = vst [vmem:[%s319 + $0x30] sm:$0xff] %v1613
        %1644 = vst [vmem:[%s319 + $0x38] sm:$0xff] %v1615
        %1645 = vst [vmem:[%s319 + $0x40] sm:$0xff] %v1618
        %1646 = vst [vmem:[%s319 + $0x48] sm:$0xff] %v1620
        %1647 = vst [vmem:[%s319 + $0x50] sm:$0xff] %v1623
        %1648 = vst [vmem:[%s319 + $0x58] sm:$0xff] %v1625
        %1649 = vst [vmem:[%s319 + $0x60] sm:$0xff] %v1628
        %1650 = vst [vmem:[%s319 + $0x68] sm:$0xff] %v1630
        %1651 = vst [vmem:[%s319 + $0x70] sm:$0xff] %v1633
        %1652 = vst [vmem:[%s319 + $0x78] sm:$0xff] %v1635
        %s1653 = sand.u32 %s149, 1
        %s1654 = scalar_lea.sflag [#allocation4], %s1653
        %s1655 = sand.u32 %s149, 1
        %s1656 = smul.addr %s1655, 128
        %s1657 = scalar_lea.vmem [#allocation10], %s1656
        // Predicated region
        $region57: #{tpu_custom_call.1} parent=39 // pred_check
          %p1658 = pneg %p159
        $region58: #{tpu_custom_call.1} parent=39 // pred_check_branch
          %1660 = sbr.rel (%p1658) target = $region60
        $region59: #{tpu_custom_call.1} parent=39 // pred_region
          %s1661 = smul.u32 16, %s26
          %1663 = vsyncadd %s1654, 0
          %s1664 = smul.addr %s1661, 8
          %s1665 = scalar_lea.hbm %s5, %s1664
          %s1666 = sshll.u32 %s1657, 4
          %s1667 = int_to_ptr.vmem [resolvable:$true] %s1666
          %s1668 = sshll.u32 %s1665, 4
          %s1669 = int_to_ptr.hbm [resolvable:$true] %s1668
          %1674 = dma.vmem_to_hbm [thread:$0]  %s1667, 2048, %s1669, %s1654, 128, 128, 8
        $region60: #{tpu_custom_call.1} parent=39 // pred_fallthru
          _
      $region40: #{tpu_custom_call.1} parent=5 // pred_fallthru
        _
      %p1675 = scmp.le.s32.totalorder 2, %s21
      // Predicated region
      $region61: #{tpu_custom_call.1} parent=5 // pred_check
        %p1676 = pneg %p1675
      $region62: #{tpu_custom_call.1} parent=5 // pred_check_branch
        %1678 = sbr.rel (%p1676) target = $region64
      $region63: #{tpu_custom_call.1} parent=5 // pred_region
        %s1679 = ssub.s32 %s21, 2
        // Predicated region
        $region65: #{tpu_custom_call.1} parent=63 // pred_check
          %p1680 = pneg %p165
        $region66: #{tpu_custom_call.1} parent=63 // pred_check_branch
          %1682 = sbr.rel (%p1680) target = $region68
        $region67: #{tpu_custom_call.1} parent=63 // pred_region
          %s1683 = sand.u32 %s150, 1
          %s1684 = scalar_lea.sflag [#allocation4], %s1683
          %s1685 = sand.u32 %s150, 1
          %s1686 = smul.addr %s1685, 128
          %s1687 = scalar_lea.vmem [#allocation10], %s1686
          %1689 = dma.done %s1684, 2048
        $region68: #{tpu_custom_call.1} parent=63 // pred_fallthru
          _
      $region64: #{tpu_custom_call.1} parent=5 // pred_fallthru
        _
    $region6: #{tpu_custom_call.1} parent=1 // loop_footer
      %s25 = sadd.s32 1, %s21
    $region7: #{tpu_custom_call.1} parent=1 // loop_footer_branch
      %20 = sbr.rel target = $region3
    $region8: #{tpu_custom_call.1} parent=1 // loop_exit
      _
    %1690 = vsyncpa [#allocation3], 1
    %s1691 = scalar_lea.sflag [#allocation3], 1
    %1692 = vsyncpa %s1691, 1
    %1693 = vsyncpa [#allocation6], 1
    %s1694 = scalar_lea.sflag [#allocation6], 1
    %1695 = vsyncpa %s1694, 1
    %1696 = vsyncpa [#allocation9], 1
    %1697 = vsyncpa [#allocation4], 1
    %s1698 = scalar_lea.sflag [#allocation4], 1
    %1699 = vsyncpa %s1698, 1

</llo_original>
